<compile_context>
chip_gen: v7x
topology: tpu7x:2x2x1
jax: 0.10.0
libtpu: 0.0.40
codegen_flags: <defaults>
</compile_context>

<pallas_src>
import functools

import jax
import jax.numpy as jnp
from jax.experimental import pallas as pl
from jax.experimental.pallas import tpu as pltpu


def _round_up(x, m):
    return ((x + m - 1) // m) * m


def _pad2(a, rows, cols):
    return jnp.pad(a, ((0, rows - a.shape[0]), (0, cols - a.shape[1])))


def _vmem_budget_bytes():
    # Generation-aware scoped-VMEM budget: v5e/v6e have 128 MiB physical,
    # v7x only 64 MiB.  Keep headroom for Mosaic-internal scratch.
    try:
        cap = int(pltpu.get_tpu_info().vmem_capacity_bytes)
    except Exception:
        cap = 64 * 1024 * 1024
    return int(max(32 * 1024 * 1024, min(cap * 3 // 4, 100 * 1024 * 1024)))


def _pick_node_tile(n, h_p, budget):
    """Largest lane-aligned node tile whose streamed working set fits VMEM."""
    n_min = _round_up(max(n, 128), 128)
    for t in (1024, 512, 256, 128):
        if t > n_min and t != 128:
            continue
        n_p = _round_up(n_min, t)
        ws = (2 * t * t              # int8 adjacency tile, double-buffered
              + 2 * t * t            # in-kernel int8 -> bf16 widened operand
              + 2 * n_p * h_p * 2    # resident XW / H1 (bf16)
              + t * h_p * 4          # f32 row accumulator
              + 2 * t * h_p * 2      # output row tile, double-buffered
              + 8 * h_p * h_p * 4)   # weights / biases / slack
        if ws <= budget * 3 // 4:
            return t
    return 128


# --------------------------------------------------------------------------
# Kernel 1: GCNConv + ReLU.  grid = (row tiles, A column tiles)
#   h1[i] = relu( dis_i * ( (adj @ (dis*XW))[i] + dis_i*XW[i] ) + b_gcn )
#         = relu( (D^-1/2 (A+I) D^-1/2 @ X Wgcn^T)[i] + b_gcn )
# --------------------------------------------------------------------------
def _gcn_kernel(adj_ref, xw_ref, dis_ref, b_ref, h1_ref, acc_ref, *, t):
    i = pl.program_id(0)
    k = pl.program_id(1)

    @pl.when(k == 0)
    def _():
        acc_ref[...] = jnp.zeros_like(acc_ref)

    kk = pl.multiple_of(k * t, t)
    # int8 tile widened in-VMEM (via f32, both converts are cheap VPU ops).
    a_tile = adj_ref[...].astype(jnp.float32).astype(jnp.bfloat16)
    acc_ref[...] += jnp.dot(a_tile, xw_ref[pl.ds(kk, t), :],
                            preferred_element_type=jnp.float32)

    @pl.when(k == pl.num_programs(1) - 1)
    def _():
        ii = pl.multiple_of(i * t, t)
        self_term = xw_ref[pl.ds(ii, t), :].astype(jnp.float32)  # self loop
        dis = dis_ref[...]                                       # (t, 1) f32
        h = dis * (acc_ref[...] + self_term) + b_ref[...]
        # dis == 0 only on padded rows -> zero them explicitly.
        h1_ref[...] = jnp.where(dis > 0, jnp.maximum(h, 0.0), 0.0
                                ).astype(h1_ref.dtype)


# --------------------------------------------------------------------------
# Kernel 2: SAGEConv (mean aggr) + ReLU, emitting H2 per row tile.
#   h2[i] = relu( (1/indeg_i)*(adj @ H1)[i] @ Wl^T + bl + H1[i] @ Wr^T )
# Row axis is "parallel" (v7x megacore); pooling happens in kernel 3.
# --------------------------------------------------------------------------
def _sage_kernel(adj_ref, h1_ref, scale_ref, valid_ref, wl_ref, bl_ref, wr_ref,
                 h2_ref, acc_ref, *, t):
    i = pl.program_id(0)
    k = pl.program_id(1)

    @pl.when(k == 0)
    def _():
        acc_ref[...] = jnp.zeros_like(acc_ref)

    kk = pl.multiple_of(k * t, t)
    a_tile = adj_ref[...].astype(jnp.float32).astype(jnp.bfloat16)
    acc_ref[...] += jnp.dot(a_tile, h1_ref[pl.ds(kk, t), :],
                            preferred_element_type=jnp.float32)

    @pl.when(k == pl.num_programs(1) - 1)
    def _():
        ii = pl.multiple_of(i * t, t)
        agg = scale_ref[...] * acc_ref[...]                      # mean aggregation, f32
        self_rows = h1_ref[pl.ds(ii, t), :].astype(jnp.float32)
        h = (jnp.dot(agg, wl_ref[...], preferred_element_type=jnp.float32)
             + bl_ref[...]
             + jnp.dot(self_rows, wr_ref[...],
                       preferred_element_type=jnp.float32))
        h2_ref[...] = (jnp.maximum(h, 0.0) * valid_ref[...]).astype(h2_ref.dtype)


# --------------------------------------------------------------------------
# Kernel 3: global_add_pool + FC head (Linear -> ReLU -> Linear).
# grid = (row tiles,); pooled sums accumulate in scratch, head runs once.
# --------------------------------------------------------------------------
def _pool_fc_kernel(p_ref, h2_ref, wfc1_ref, bfc1_ref, wfc2_ref, bfc2_ref,
                    out_ref, pooled_ref):
    i = pl.program_id(0)

    @pl.when(i == 0)
    def _():
        pooled_ref[...] = jnp.zeros_like(pooled_ref)

    pooled_ref[...] += jnp.dot(p_ref[...], h2_ref[...],
                               preferred_element_type=jnp.float32)

    @pl.when(i == pl.num_programs(0) - 1)
    def _():
        z = jnp.dot(pooled_ref[...], wfc1_ref[...],
                    preferred_element_type=jnp.float32) + bfc1_ref[...]
        z = jnp.maximum(z, 0.0)
        out = jnp.dot(z, wfc2_ref[...],
                      preferred_element_type=jnp.float32) + bfc2_ref[...]
        out_ref[...] = out.astype(out_ref.dtype)


@functools.partial(jax.jit, static_argnames=("num_graphs",))
def hybrid_gcn_sage(x, edge_index, batch, params, *, num_graphs):
    """Plain-JAX glue (densify + fold + pad), then the three Pallas kernels."""
    n, _ = x.shape
    (wgcn, bgcn, wl, bl, wr, wfc1, bfc1, wfc2, bfc2) = params
    hidden = wgcn.shape[0]
    out_dim = wfc2.shape[0]

    src, tgt = edge_index[0], edge_index[1]
    # One shared integer adjacency (message flow src -> tgt), built once.
    adj = jnp.zeros((n, n), jnp.int32).at[tgt, src].add(1)
    indeg = jnp.sum(adj, axis=1)
    deg_gcn = (indeg + 1).astype(jnp.float32)            # + self loop (>= 1)
    dis = jax.lax.rsqrt(deg_gcn)                         # D^-1/2, always > 0
    sage_scale = jnp.where(indeg > 0,
                           1.0 / jnp.maximum(indeg, 1).astype(jnp.float32),
                           0.0)
    pool = (batch[None, :] == jnp.arange(num_graphs, dtype=batch.dtype)[:, None]
            ).astype(jnp.float32)

    # Fold Wgcn into X (removes the per-tile epilogue matmul + one rounding),
    # pre-scale rows by D^-1/2 so the kernels stream only the raw adjacency.
    xw = x.astype(jnp.float32) @ wgcn.T.astype(jnp.float32)
    xw_s = dis[:, None] * xw

    # ---- pad to lane-dense (multiple-of-128) / tile-aligned shapes ----
    h_p = _round_up(hidden, 128)
    o_p = _round_up(out_dim, 128)
    g_p = _round_up(num_graphs, 8)
    budget = _vmem_budget_bytes()
    t = _pick_node_tile(n, h_p, budget)
    n_p = _round_up(max(n, t), t)
    nt = n_p // t

    f32, bf16 = jnp.float32, jnp.bfloat16
    adj_p = _pad2(adj.astype(jnp.int8), n_p, n_p)         # shared int8 stream
    xw_p = _pad2(xw_s, n_p, h_p).astype(bf16)
    dis_p = _pad2(dis[:, None], n_p, 1)                   # zeros on padded rows
    sage_p = _pad2(sage_scale[:, None], n_p, 1)
    valid_p = _pad2(jnp.ones((n, 1), f32), n_p, 1)
    pool_p = _pad2(pool, g_p, n_p).astype(bf16)

    bgcn_p = _pad2(bgcn[None, :].astype(f32), 1, h_p)
    wl_t = _pad2(wl.T.astype(f32), h_p, h_p)
    bl_p = _pad2(bl[None, :].astype(f32), 1, h_p)
    wr_t = _pad2(wr.T.astype(f32), h_p, h_p)
    wfc1_t = _pad2(wfc1.T.astype(f32), h_p, h_p)
    bfc1_p = _pad2(bfc1[None, :].astype(f32), 1, h_p)
    wfc2_t = _pad2(wfc2.T.astype(f32), h_p, o_p)
    bfc2_p = _pad2(bfc2[None, :].astype(f32), 1, o_p)

    # ---- kernel 1: GCNConv + ReLU ----
    h1 = pl.pallas_call(
        functools.partial(_gcn_kernel, t=t),
        out_shape=jax.ShapeDtypeStruct((n_p, h_p), bf16),
        grid_spec=pltpu.PrefetchScalarGridSpec(
            num_scalar_prefetch=0,
            grid=(nt, nt),
            in_specs=[
                pl.BlockSpec((t, t), lambda i, k: (i, k)),        # adj tile (int8)
                pl.BlockSpec((n_p, h_p), lambda i, k: (0, 0)),    # XW*dis (resident)
                pl.BlockSpec((t, 1), lambda i, k: (i, 0)),        # D^-1/2 rows
                pl.BlockSpec((1, h_p), lambda i, k: (0, 0)),      # b_gcn
            ],
            out_specs=pl.BlockSpec((t, h_p), lambda i, k: (i, 0)),
            scratch_shapes=[pltpu.VMEM((t, h_p), jnp.float32)],
        ),
        compiler_params=pltpu.CompilerParams(
            dimension_semantics=("parallel", "arbitrary"),
            vmem_limit_bytes=budget,
        ),
    )(adj_p, xw_p, dis_p, bgcn_p)

    # ---- kernel 2: SAGEConv (mean) + ReLU, per-row-tile H2 ----
    h2 = pl.pallas_call(
        functools.partial(_sage_kernel, t=t),
        out_shape=jax.ShapeDtypeStruct((n_p, h_p), bf16),
        grid_spec=pltpu.PrefetchScalarGridSpec(
            num_scalar_prefetch=0,
            grid=(nt, nt),
            in_specs=[
                pl.BlockSpec((t, t), lambda i, k: (i, k)),        # adj tile (int8)
                pl.BlockSpec((n_p, h_p), lambda i, k: (0, 0)),    # H1 (resident)
                pl.BlockSpec((t, 1), lambda i, k: (i, 0)),        # 1/indeg rows
                pl.BlockSpec((t, 1), lambda i, k: (i, 0)),        # valid-row mask
                pl.BlockSpec((h_p, h_p), lambda i, k: (0, 0)),    # Wl^T (f32)
                pl.BlockSpec((1, h_p), lambda i, k: (0, 0)),      # bl
                pl.BlockSpec((h_p, h_p), lambda i, k: (0, 0)),    # Wr^T (f32)
            ],
            out_specs=pl.BlockSpec((t, h_p), lambda i, k: (i, 0)),
            scratch_shapes=[pltpu.VMEM((t, h_p), jnp.float32)],
        ),
        compiler_params=pltpu.CompilerParams(
            dimension_semantics=("parallel", "arbitrary"),
            vmem_limit_bytes=budget,
        ),
    )(adj_p, h1, sage_p, valid_p, wl_t, bl_p, wr_t)

    # ---- kernel 3: global_add_pool + MLP head (tiny, sequential) ----
    out_p = pl.pallas_call(
        _pool_fc_kernel,
        out_shape=jax.ShapeDtypeStruct((g_p, o_p), jnp.float32),
        grid_spec=pltpu.PrefetchScalarGridSpec(
            num_scalar_prefetch=0,
            grid=(nt,),
            in_specs=[
                pl.BlockSpec((g_p, t), lambda i: (0, i)),         # pool columns
                pl.BlockSpec((t, h_p), lambda i: (i, 0)),         # H2 row tile
                pl.BlockSpec((h_p, h_p), lambda i: (0, 0)),       # Wfc1^T
                pl.BlockSpec((1, h_p), lambda i: (0, 0)),         # bfc1
                pl.BlockSpec((h_p, o_p), lambda i: (0, 0)),       # Wfc2^T
                pl.BlockSpec((1, o_p), lambda i: (0, 0)),         # bfc2
            ],
            out_specs=pl.BlockSpec((g_p, o_p), lambda i: (0, 0)),
            scratch_shapes=[pltpu.VMEM((g_p, h_p), jnp.float32)],
        ),
        compiler_params=pltpu.CompilerParams(
            dimension_semantics=("arbitrary",),
            vmem_limit_bytes=budget,
        ),
    )(pool_p, h2, wfc1_t, bfc1_p, wfc2_t, bfc2_p)

    return out_p[:num_graphs, :out_dim]


def _reference(x, edge_index, batch, params, num_graphs):
    """Pure-JAX f32 reference for correctness checking."""
    n = x.shape[0]
    src, tgt = edge_index[0], edge_index[1]
    a = jnp.zeros((n, n), jnp.float32).at[tgt, src].add(1.0) + jnp.eye(n)
    deg = a.sum(1)
    dis = jnp.where(deg > 0, deg ** -0.5, 0.0)
    a_gcn = dis[:, None] * a * dis[None, :]
    b = jnp.zeros((n, n), jnp.float32).at[tgt, src].add(1.0)
    indeg = b.sum(1)
    a_sage = b * jnp.where(indeg > 0, 1.0 / jnp.maximum(indeg, 1.0), 0.0)[:, None]
    pool = (batch[None, :] == jnp.arange(num_graphs)[:, None]).astype(jnp.float32)

    wgcn, bgcn, wl, bl, wr, wfc1, bfc1, wfc2, bfc2 = params
    h1 = jax.nn.relu(a_gcn @ (x @ wgcn.T) + bgcn)
    h2 = jax.nn.relu((a_sage @ h1) @ wl.T + bl + h1 @ wr.T)
    pooled = pool @ h2
    z = jax.nn.relu(pooled @ wfc1.T + bfc1)
    return z @ wfc2.T + bfc2


if __name__ == "__main__":
    input_dim, hidden_dim, output_dim = 8, 32, 3
    num_nodes, num_edges, num_graphs = 16, 40, 2

    key = jax.random.PRNGKey(0)
    keys = jax.random.split(key, 12)

    # Node features, edges, batch assignment (batch[-1] + 1 = 2 < 50 -> add pool).
    x = jax.random.normal(keys[0], (num_nodes, input_dim), jnp.float32)
    src = jax.random.randint(keys[1], (num_edges,), 0, num_nodes, jnp.int32)
    tgt = jax.random.randint(keys[2], (num_edges,), 0, num_nodes, jnp.int32)
    edge_index = jnp.stack([src, tgt], axis=0)
    batch = jnp.concatenate([
        jnp.zeros((num_nodes // 2,), jnp.int32),
        jnp.ones((num_nodes - num_nodes // 2,), jnp.int32),
    ])

    def winit(k, shape):
        return 0.1 * jax.random.normal(k, shape, jnp.float32)

    params = (
        winit(keys[3], (hidden_dim, input_dim)),    # GCN lin weight
        winit(keys[4], (hidden_dim,)),              # GCN bias
        winit(keys[5], (hidden_dim, hidden_dim)),   # SAGE lin_l weight
        winit(keys[6], (hidden_dim,)),              # SAGE lin_l bias
        winit(keys[7], (hidden_dim, hidden_dim)),   # SAGE lin_r weight (no bias)
        winit(keys[8], (hidden_dim, hidden_dim)),   # fc1 weight
        winit(keys[9], (hidden_dim,)),              # fc1 bias
        winit(keys[10], (output_dim, hidden_dim)),  # fc2 weight
        winit(keys[11], (output_dim,)),             # fc2 bias
    )

    out = hybrid_gcn_sage(x, edge_index, batch, params, num_graphs=num_graphs)
    out = jax.block_until_ready(out)

    ref = _reference(x, edge_index, batch, params, num_graphs)
    assert out.shape == (num_graphs, output_dim)
    # bf16 matmul operands (f32 accumulation) -> compare with loosened tolerance.
    assert jnp.allclose(out, ref, atol=3e-2, rtol=3e-2), (out, ref)

    print("KERNEL_OK")
</pallas_src>

<mosaic_0001>
module attributes {stable_mosaic.version = 11 : i64} {
  func.func @_gcn_kernel(%arg0: i32, %arg1: i32, %arg2: memref<128x128xi8, #tpu.memory_space<vmem>>, %arg3: memref<128x128xbf16, #tpu.memory_space<vmem>>, %arg4: memref<128x1xf32, #tpu.memory_space<vmem>>, %arg5: memref<1x128xf32, #tpu.memory_space<vmem>>, %arg6: memref<128x128xbf16, #tpu.memory_space<vmem>>, %arg7: memref<128x128xf32, #tpu.memory_space<vmem>>) attributes {dimension_semantics = [#tpu.dimension_semantics<parallel>, #tpu.dimension_semantics<arbitrary>], iteration_bounds = array<i64: 1, 1>, scalar_prefetch = 0 : i64, scratch_operands = 1 : i64, tpu.core_type = #tpu.core_type<tc>, window_params = [{transform_indices = @transform_0, window_bounds = array<i64: 128, 128>}, {pipeline_mode = #tpu.pipeline_mode<synchronous>, transform_indices = @transform_1, window_bounds = array<i64: 128, 128>}, {transform_indices = @transform_2, window_bounds = array<i64: 128, 1>}, {pipeline_mode = #tpu.pipeline_mode<synchronous>, transform_indices = @transform_3, window_bounds = array<i64: 1, 128>}, {transform_indices = @transform_4, window_bounds = array<i64: 128, 128>}]} {
    %c0_i32 = arith.constant 0 : i32
    %0 = arith.cmpi eq, %arg1, %c0_i32 : i32
    %1 = arith.extui %0 : i1 to i32
    %c0_i32_0 = arith.constant 0 : i32
    %2 = arith.cmpi ne, %1, %c0_i32_0 : i32
    scf.if %2 {
      %cst_9 = arith.constant 0.000000e+00 : f32
      %17 = vector.broadcast %cst_9 : f32 to vector<128x128xf32>
      %c0_10 = arith.constant 0 : index
      %c0_11 = arith.constant 0 : index
      %18 = vector.load %arg7[%c0_10, %c0_11] : memref<128x128xf32, #tpu.memory_space<vmem>>, vector<128x128xf32>
      tpu.vector_store %arg7[%c0_10, %c0_11], %17 {strides = array<i32>} : memref<128x128xf32, #tpu.memory_space<vmem>>, vector<128x128xf32>,
    } else {
    }
    %c128_i32 = arith.constant 128 : i32
    %3 = arith.muli %arg1, %c128_i32 : i32
    %4 = tpu.assume_multiple %3, 128 : i32
    %c0 = arith.constant 0 : index
    %c0_1 = arith.constant 0 : index
    %5 = vector.load %arg2[%c0, %c0_1] : memref<128x128xi8, #tpu.memory_space<vmem>>, vector<128x128xi8>
    %6 = arith.sitofp %5 : vector<128x128xi8> to vector<128x128xf32>
    %7 = arith.truncf %6 : vector<128x128xf32> to vector<128x128xbf16>
    %c0_2 = arith.constant 0 : index
    %c0_3 = arith.constant 0 : index
    %8 = vector.load %arg7[%c0_2, %c0_3] : memref<128x128xf32, #tpu.memory_space<vmem>>, vector<128x128xf32>
    %9 = arith.index_cast %4 : i32 to index
    %c0_4 = arith.constant 0 : index
    %10 = vector.load %arg3[%9, %c0_4] : memref<128x128xbf16, #tpu.memory_space<vmem>>, vector<128x128xbf16>
    %cst = arith.constant dense<0.000000e+00> : vector<128x128xf32>
    %11 = tpu.matmul %7, %10, %cst {dimension_numbers = #tpu.dot_dimension_numbers<[1], [0], [0], [1], [0, 0, 1, 1], [], []>} : vector<128x128xbf16>, vector<128x128xbf16>, vector<128x128xf32> -> vector<128x128xf32>
    %12 = arith.addf %8, %11 : vector<128x128xf32>
    %c0_5 = arith.constant 0 : index
    %c0_6 = arith.constant 0 : index
    %13 = vector.load %arg7[%c0_5, %c0_6] : memref<128x128xf32, #tpu.memory_space<vmem>>, vector<128x128xf32>
    tpu.vector_store %arg7[%c0_5, %c0_6], %12 {strides = array<i32>} : memref<128x128xf32, #tpu.memory_space<vmem>>, vector<128x128xf32>,
    %c0_i32_7 = arith.constant 0 : i32
    %14 = arith.cmpi eq, %arg1, %c0_i32_7 : i32
    %15 = arith.extui %14 : i1 to i32
    %c0_i32_8 = arith.constant 0 : i32
    %16 = arith.cmpi ne, %15, %c0_i32_8 : i32
    scf.if %16 {
      %c128_i32_9 = arith.constant 128 : i32
      %17 = arith.muli %arg0, %c128_i32_9 : i32
      %18 = tpu.assume_multiple %17, 128 : i32
      %19 = arith.index_cast %18 : i32 to index
      %c0_10 = arith.constant 0 : index
      %20 = vector.load %arg3[%19, %c0_10] : memref<128x128xbf16, #tpu.memory_space<vmem>>, vector<128x128xbf16>
      %21 = arith.extf %20 : vector<128x128xbf16> to vector<128x128xf32>
      %c0_11 = arith.constant 0 : index
      %c0_12 = arith.constant 0 : index
      %22 = vector.load %arg4[%c0_11, %c0_12] : memref<128x1xf32, #tpu.memory_space<vmem>>, vector<128x1xf32>
      %c0_13 = arith.constant 0 : index
      %c0_14 = arith.constant 0 : index
      %23 = vector.load %arg7[%c0_13, %c0_14] : memref<128x128xf32, #tpu.memory_space<vmem>>, vector<128x128xf32>
      %24 = arith.addf %23, %21 : vector<128x128xf32>
      %25 = vector.broadcast %22 : vector<128x1xf32> to vector<128x128xf32>
      %26 = arith.mulf %25, %24 : vector<128x128xf32>
      %c0_15 = arith.constant 0 : index
      %c0_16 = arith.constant 0 : index
      %27 = vector.load %arg5[%c0_15, %c0_16] : memref<1x128xf32, #tpu.memory_space<vmem>>, vector<1x128xf32>
      %28 = vector.broadcast %27 : vector<1x128xf32> to vector<128x128xf32>
      %29 = arith.addf %26, %28 : vector<128x128xf32>
      %cst_17 = arith.constant 0.000000e+00 : f32
      %30 = vector.broadcast %cst_17 : f32 to vector<128x1xf32>
      %31 = arith.cmpf ogt, %22, %30 : vector<128x1xf32>
      %cst_18 = arith.constant 0.000000e+00 : f32
      %32 = vector.broadcast %cst_18 : f32 to vector<128x128xf32>
      %33 = arith.maximumf %29, %32 : vector<128x128xf32>
      %cst_19 = arith.constant 0.000000e+00 : f32
      %34 = vector.shape_cast %31 : vector<128x1xi1> to vector<128x1xi1>
      %35 = vector.broadcast %34 : vector<128x1xi1> to vector<128x128xi1>
      %36 = vector.broadcast %cst_19 : f32 to vector<128x128xf32>
      %37 = arith.select %35, %33, %36 : vector<128x128xi1>, vector<128x128xf32>
      %38 = arith.truncf %37 : vector<128x128xf32> to vector<128x128xbf16>
      %c0_20 = arith.constant 0 : index
      %c0_21 = arith.constant 0 : index
      %39 = vector.load %arg6[%c0_20, %c0_21] : memref<128x128xbf16, #tpu.memory_space<vmem>>, vector<128x128xbf16>
      tpu.vector_store %arg6[%c0_20, %c0_21], %38 {strides = array<i32>} : memref<128x128xbf16, #tpu.memory_space<vmem>>, vector<128x128xbf16>,
    } else {
    }
    return
  }
  func.func @transform_0(%arg0: i32, %arg1: i32) -> (i32, i32) {
    %c0_i32 = arith.constant 0 : i32
    return %arg0, %arg1 : i32, i32
  }
  func.func @transform_1(%arg0: i32, %arg1: i32) -> (i32, i32) {
    %c0_i32 = arith.constant 0 : i32
    %c0_i32_0 = arith.constant 0 : i32
    %c0_i32_1 = arith.constant 0 : i32
    return %c0_i32, %c0_i32_0 : i32, i32
  }
  func.func @transform_2(%arg0: i32, %arg1: i32) -> (i32, i32) {
    %c0_i32 = arith.constant 0 : i32
    %c0_i32_0 = arith.constant 0 : i32
    return %arg0, %c0_i32 : i32, i32
  }
  func.func @transform_3(%arg0: i32, %arg1: i32) -> (i32, i32) {
    %c0_i32 = arith.constant 0 : i32
    %c0_i32_0 = arith.constant 0 : i32
    %c0_i32_1 = arith.constant 0 : i32
    return %c0_i32, %c0_i32_0 : i32, i32
  }
  func.func @transform_4(%arg0: i32, %arg1: i32) -> (i32, i32) {
    %c0_i32 = arith.constant 0 : i32
    %c0_i32_0 = arith.constant 0 : i32
    return %arg0, %c0_i32 : i32, i32
  }
}

module attributes {stable_mosaic.version = 11 : i64} {
  func.func @_sage_kernel(%arg0: i32, %arg1: i32, %arg2: memref<128x128xi8, #tpu.memory_space<vmem>>, %arg3: memref<128x128xbf16, #tpu.memory_space<vmem>>, %arg4: memref<128x1xf32, #tpu.memory_space<vmem>>, %arg5: memref<128x1xf32, #tpu.memory_space<vmem>>, %arg6: memref<128x128xf32, #tpu.memory_space<vmem>>, %arg7: memref<1x128xf32, #tpu.memory_space<vmem>>, %arg8: memref<128x128xf32, #tpu.memory_space<vmem>>, %arg9: memref<128x128xbf16, #tpu.memory_space<vmem>>, %arg10: memref<128x128xf32, #tpu.memory_space<vmem>>) attributes {dimension_semantics = [#tpu.dimension_semantics<parallel>, #tpu.dimension_semantics<arbitrary>], iteration_bounds = array<i64: 1, 1>, scalar_prefetch = 0 : i64, scratch_operands = 1 : i64, tpu.core_type = #tpu.core_type<tc>, window_params = [{transform_indices = @transform_0, window_bounds = array<i64: 128, 128>}, {pipeline_mode = #tpu.pipeline_mode<synchronous>, transform_indices = @transform_1, window_bounds = array<i64: 128, 128>}, {transform_indices = @transform_2, window_bounds = array<i64: 128, 1>}, {transform_indices = @transform_3, window_bounds = array<i64: 128, 1>}, {pipeline_mode = #tpu.pipeline_mode<synchronous>, transform_indices = @transform_4, window_bounds = array<i64: 128, 128>}, {pipeline_mode = #tpu.pipeline_mode<synchronous>, transform_indices = @transform_5, window_bounds = array<i64: 1, 128>}, {pipeline_mode = #tpu.pipeline_mode<synchronous>, transform_indices = @transform_6, window_bounds = array<i64: 128, 128>}, {transform_indices = @transform_7, window_bounds = array<i64: 128, 128>}]} {
    %c0_i32 = arith.constant 0 : i32
    %0 = arith.cmpi eq, %arg1, %c0_i32 : i32
    %1 = arith.extui %0 : i1 to i32
    %c0_i32_0 = arith.constant 0 : i32
    %2 = arith.cmpi ne, %1, %c0_i32_0 : i32
    scf.if %2 {
      %cst_9 = arith.constant 0.000000e+00 : f32
      %17 = vector.broadcast %cst_9 : f32 to vector<128x128xf32>
      %c0_10 = arith.constant 0 : index
      %c0_11 = arith.constant 0 : index
      %18 = vector.load %arg10[%c0_10, %c0_11] : memref<128x128xf32, #tpu.memory_space<vmem>>, vector<128x128xf32>
      tpu.vector_store %arg10[%c0_10, %c0_11], %17 {strides = array<i32>} : memref<128x128xf32, #tpu.memory_space<vmem>>, vector<128x128xf32>,
    } else {
    }
    %c128_i32 = arith.constant 128 : i32
    %3 = arith.muli %arg1, %c128_i32 : i32
    %4 = tpu.assume_multiple %3, 128 : i32
    %c0 = arith.constant 0 : index
    %c0_1 = arith.constant 0 : index
    %5 = vector.load %arg2[%c0, %c0_1] : memref<128x128xi8, #tpu.memory_space<vmem>>, vector<128x128xi8>
    %6 = arith.sitofp %5 : vector<128x128xi8> to vector<128x128xf32>
    %7 = arith.truncf %6 : vector<128x128xf32> to vector<128x128xbf16>
    %c0_2 = arith.constant 0 : index
    %c0_3 = arith.constant 0 : index
    %8 = vector.load %arg10[%c0_2, %c0_3] : memref<128x128xf32, #tpu.memory_space<vmem>>, vector<128x128xf32>
    %9 = arith.index_cast %4 : i32 to index
    %c0_4 = arith.constant 0 : index
    %10 = vector.load %arg3[%9, %c0_4] : memref<128x128xbf16, #tpu.memory_space<vmem>>, vector<128x128xbf16>
    %cst = arith.constant dense<0.000000e+00> : vector<128x128xf32>
    %11 = tpu.matmul %7, %10, %cst {dimension_numbers = #tpu.dot_dimension_numbers<[1], [0], [0], [1], [0, 0, 1, 1], [], []>} : vector<128x128xbf16>, vector<128x128xbf16>, vector<128x128xf32> -> vector<128x128xf32>
    %12 = arith.addf %8, %11 : vector<128x128xf32>
    %c0_5 = arith.constant 0 : index
    %c0_6 = arith.constant 0 : index
    %13 = vector.load %arg10[%c0_5, %c0_6] : memref<128x128xf32, #tpu.memory_space<vmem>>, vector<128x128xf32>
    tpu.vector_store %arg10[%c0_5, %c0_6], %12 {strides = array<i32>} : memref<128x128xf32, #tpu.memory_space<vmem>>, vector<128x128xf32>,
    %c0_i32_7 = arith.constant 0 : i32
    %14 = arith.cmpi eq, %arg1, %c0_i32_7 : i32
    %15 = arith.extui %14 : i1 to i32
    %c0_i32_8 = arith.constant 0 : i32
    %16 = arith.cmpi ne, %15, %c0_i32_8 : i32
    scf.if %16 {
      %c128_i32_9 = arith.constant 128 : i32
      %17 = arith.muli %arg0, %c128_i32_9 : i32
      %18 = tpu.assume_multiple %17, 128 : i32
      %c0_10 = arith.constant 0 : index
      %c0_11 = arith.constant 0 : index
      %19 = vector.load %arg4[%c0_10, %c0_11] : memref<128x1xf32, #tpu.memory_space<vmem>>, vector<128x1xf32>
      %c0_12 = arith.constant 0 : index
      %c0_13 = arith.constant 0 : index
      %20 = vector.load %arg10[%c0_12, %c0_13] : memref<128x128xf32, #tpu.memory_space<vmem>>, vector<128x128xf32>
      %21 = vector.broadcast %19 : vector<128x1xf32> to vector<128x128xf32>
      %22 = arith.mulf %21, %20 : vector<128x128xf32>
      %23 = arith.index_cast %18 : i32 to index
      %c0_14 = arith.constant 0 : index
      %24 = vector.load %arg3[%23, %c0_14] : memref<128x128xbf16, #tpu.memory_space<vmem>>, vector<128x128xbf16>
      %25 = arith.extf %24 : vector<128x128xbf16> to vector<128x128xf32>
      %c0_15 = arith.constant 0 : index
      %c0_16 = arith.constant 0 : index
      %26 = vector.load %arg6[%c0_15, %c0_16] : memref<128x128xf32, #tpu.memory_space<vmem>>, vector<128x128xf32>
      %cst_17 = arith.constant dense<0.000000e+00> : vector<128x128xf32>
      %27 = tpu.matmul %22, %26, %cst_17 {dimension_numbers = #tpu.dot_dimension_numbers<[1], [0], [0], [1], [0, 0, 1, 1], [], []>} : vector<128x128xf32>, vector<128x128xf32>, vector<128x128xf32> -> vector<128x128xf32>
      %c0_18 = arith.constant 0 : index
      %c0_19 = arith.constant 0 : index
      %28 = vector.load %arg7[%c0_18, %c0_19] : memref<1x128xf32, #tpu.memory_space<vmem>>, vector<1x128xf32>
      %29 = vector.broadcast %28 : vector<1x128xf32> to vector<128x128xf32>
      %30 = arith.addf %27, %29 : vector<128x128xf32>
      %c0_20 = arith.constant 0 : index
      %c0_21 = arith.constant 0 : index
      %31 = vector.load %arg8[%c0_20, %c0_21] : memref<128x128xf32, #tpu.memory_space<vmem>>, vector<128x128xf32>
      %cst_22 = arith.constant dense<0.000000e+00> : vector<128x128xf32>
      %32 = tpu.matmul %25, %31, %cst_22 {dimension_numbers = #tpu.dot_dimension_numbers<[1], [0], [0], [1], [0, 0, 1, 1], [], []>} : vector<128x128xf32>, vector<128x128xf32>, vector<128x128xf32> -> vector<128x128xf32>
      %33 = arith.addf %30, %32 : vector<128x128xf32>
      %cst_23 = arith.constant 0.000000e+00 : f32
      %34 = vector.broadcast %cst_23 : f32 to vector<128x128xf32>
      %35 = arith.maximumf %33, %34 : vector<128x128xf32>
      %c0_24 = arith.constant 0 : index
      %c0_25 = arith.constant 0 : index
      %36 = vector.load %arg5[%c0_24, %c0_25] : memref<128x1xf32, #tpu.memory_space<vmem>>, vector<128x1xf32>
      %37 = vector.broadcast %36 : vector<128x1xf32> to vector<128x128xf32>
      %38 = arith.mulf %35, %37 : vector<128x128xf32>
      %39 = arith.truncf %38 : vector<128x128xf32> to vector<128x128xbf16>
      %c0_26 = arith.constant 0 : index
      %c0_27 = arith.constant 0 : index
      %40 = vector.load %arg9[%c0_26, %c0_27] : memref<128x128xbf16, #tpu.memory_space<vmem>>, vector<128x128xbf16>
      tpu.vector_store %arg9[%c0_26, %c0_27], %39 {strides = array<i32>} : memref<128x128xbf16, #tpu.memory_space<vmem>>, vector<128x128xbf16>,
    } else {
    }
    return
  }
  func.func @transform_0(%arg0: i32, %arg1: i32) -> (i32, i32) {
    %c0_i32 = arith.constant 0 : i32
    return %arg0, %arg1 : i32, i32
  }
  func.func @transform_1(%arg0: i32, %arg1: i32) -> (i32, i32) {
    %c0_i32 = arith.constant 0 : i32
    %c0_i32_0 = arith.constant 0 : i32
    %c0_i32_1 = arith.constant 0 : i32
    return %c0_i32, %c0_i32_0 : i32, i32
  }
  func.func @transform_2(%arg0: i32, %arg1: i32) -> (i32, i32) {
    %c0_i32 = arith.constant 0 : i32
    %c0_i32_0 = arith.constant 0 : i32
    return %arg0, %c0_i32 : i32, i32
  }
  func.func @transform_3(%arg0: i32, %arg1: i32) -> (i32, i32) {
    %c0_i32 = arith.constant 0 : i32
    %c0_i32_0 = arith.constant 0 : i32
    return %arg0, %c0_i32 : i32, i32
  }
  func.func @transform_4(%arg0: i32, %arg1: i32) -> (i32, i32) {
    %c0_i32 = arith.constant 0 : i32
    %c0_i32_0 = arith.constant 0 : i32
    %c0_i32_1 = arith.constant 0 : i32
    return %c0_i32, %c0_i32_0 : i32, i32
  }
  func.func @transform_5(%arg0: i32, %arg1: i32) -> (i32, i32) {
    %c0_i32 = arith.constant 0 : i32
    %c0_i32_0 = arith.constant 0 : i32
    %c0_i32_1 = arith.constant 0 : i32
    return %c0_i32, %c0_i32_0 : i32, i32
  }
  func.func @transform_6(%arg0: i32, %arg1: i32) -> (i32, i32) {
    %c0_i32 = arith.constant 0 : i32
    %c0_i32_0 = arith.constant 0 : i32
    %c0_i32_1 = arith.constant 0 : i32
    return %c0_i32, %c0_i32_0 : i32, i32
  }
  func.func @transform_7(%arg0: i32, %arg1: i32) -> (i32, i32) {
    %c0_i32 = arith.constant 0 : i32
    %c0_i32_0 = arith.constant 0 : i32
    return %arg0, %c0_i32 : i32, i32
  }
}

module attributes {stable_mosaic.version = 11 : i64} {
  func.func @_pool_fc_kernel(%arg0: i32, %arg1: memref<8x128xbf16, #tpu.memory_space<vmem>>, %arg2: memref<128x128xbf16, #tpu.memory_space<vmem>>, %arg3: memref<128x128xf32, #tpu.memory_space<vmem>>, %arg4: memref<1x128xf32, #tpu.memory_space<vmem>>, %arg5: memref<128x128xf32, #tpu.memory_space<vmem>>, %arg6: memref<1x128xf32, #tpu.memory_space<vmem>>, %arg7: memref<8x128xf32, #tpu.memory_space<vmem>>, %arg8: memref<8x128xf32, #tpu.memory_space<vmem>>) attributes {dimension_semantics = [#tpu.dimension_semantics<arbitrary>], iteration_bounds = array<i64: 1>, scalar_prefetch = 0 : i64, scratch_operands = 1 : i64, tpu.core_type = #tpu.core_type<tc>, window_params = [{transform_indices = @transform_0, window_bounds = array<i64: 8, 128>}, {transform_indices = @transform_1, window_bounds = array<i64: 128, 128>}, {pipeline_mode = #tpu.pipeline_mode<synchronous>, transform_indices = @transform_2, window_bounds = array<i64: 128, 128>}, {pipeline_mode = #tpu.pipeline_mode<synchronous>, transform_indices = @transform_3, window_bounds = array<i64: 1, 128>}, {pipeline_mode = #tpu.pipeline_mode<synchronous>, transform_indices = @transform_4, window_bounds = array<i64: 128, 128>}, {pipeline_mode = #tpu.pipeline_mode<synchronous>, transform_indices = @transform_5, window_bounds = array<i64: 1, 128>}, {pipeline_mode = #tpu.pipeline_mode<synchronous>, transform_indices = @transform_6, window_bounds = array<i64: 8, 128>}]} {
    %c0_i32 = arith.constant 0 : i32
    %0 = arith.cmpi eq, %arg0, %c0_i32 : i32
    %1 = arith.extui %0 : i1 to i32
    %c0_i32_0 = arith.constant 0 : i32
    %2 = arith.cmpi ne, %1, %c0_i32_0 : i32
    scf.if %2 {
      %cst_10 = arith.constant 0.000000e+00 : f32
      %12 = vector.broadcast %cst_10 : f32 to vector<8x128xf32>
      %c0_11 = arith.constant 0 : index
      %c0_12 = arith.constant 0 : index
      %13 = vector.load %arg8[%c0_11, %c0_12] : memref<8x128xf32, #tpu.memory_space<vmem>>, vector<8x128xf32>
      tpu.vector_store %arg8[%c0_11, %c0_12], %12 {strides = array<i32>} : memref<8x128xf32, #tpu.memory_space<vmem>>, vector<8x128xf32>,
    } else {
    }
    %c0 = arith.constant 0 : index
    %c0_1 = arith.constant 0 : index
    %3 = vector.load %arg8[%c0, %c0_1] : memref<8x128xf32, #tpu.memory_space<vmem>>, vector<8x128xf32>
    %c0_2 = arith.constant 0 : index
    %c0_3 = arith.constant 0 : index
    %4 = vector.load %arg1[%c0_2, %c0_3] : memref<8x128xbf16, #tpu.memory_space<vmem>>, vector<8x128xbf16>
    %c0_4 = arith.constant 0 : index
    %c0_5 = arith.constant 0 : index
    %5 = vector.load %arg2[%c0_4, %c0_5] : memref<128x128xbf16, #tpu.memory_space<vmem>>, vector<128x128xbf16>
    %cst = arith.constant dense<0.000000e+00> : vector<8x128xf32>
    %6 = tpu.matmul %4, %5, %cst {dimension_numbers = #tpu.dot_dimension_numbers<[1], [0], [0], [1], [0, 0, 1, 1], [], []>} : vector<8x128xbf16>, vector<128x128xbf16>, vector<8x128xf32> -> vector<8x128xf32>
    %7 = arith.addf %3, %6 : vector<8x128xf32>
    %c0_6 = arith.constant 0 : index
    %c0_7 = arith.constant 0 : index
    %8 = vector.load %arg8[%c0_6, %c0_7] : memref<8x128xf32, #tpu.memory_space<vmem>>, vector<8x128xf32>
    tpu.vector_store %arg8[%c0_6, %c0_7], %7 {strides = array<i32>} : memref<8x128xf32, #tpu.memory_space<vmem>>, vector<8x128xf32>,
    %c0_i32_8 = arith.constant 0 : i32
    %9 = arith.cmpi eq, %arg0, %c0_i32_8 : i32
    %10 = arith.extui %9 : i1 to i32
    %c0_i32_9 = arith.constant 0 : i32
    %11 = arith.cmpi ne, %10, %c0_i32_9 : i32
    scf.if %11 {
      %c0_10 = arith.constant 0 : index
      %c0_11 = arith.constant 0 : index
      %12 = vector.load %arg8[%c0_10, %c0_11] : memref<8x128xf32, #tpu.memory_space<vmem>>, vector<8x128xf32>
      %c0_12 = arith.constant 0 : index
      %c0_13 = arith.constant 0 : index
      %13 = vector.load %arg3[%c0_12, %c0_13] : memref<128x128xf32, #tpu.memory_space<vmem>>, vector<128x128xf32>
      %cst_14 = arith.constant dense<0.000000e+00> : vector<8x128xf32>
      %14 = tpu.matmul %12, %13, %cst_14 {dimension_numbers = #tpu.dot_dimension_numbers<[1], [0], [0], [1], [0, 0, 1, 1], [], []>} : vector<8x128xf32>, vector<128x128xf32>, vector<8x128xf32> -> vector<8x128xf32>
      %c0_15 = arith.constant 0 : index
      %c0_16 = arith.constant 0 : index
      %15 = vector.load %arg4[%c0_15, %c0_16] : memref<1x128xf32, #tpu.memory_space<vmem>>, vector<1x128xf32>
      %16 = vector.broadcast %15 : vector<1x128xf32> to vector<8x128xf32>
      %17 = arith.addf %14, %16 : vector<8x128xf32>
      %cst_17 = arith.constant 0.000000e+00 : f32
      %18 = vector.broadcast %cst_17 : f32 to vector<8x128xf32>
      %19 = arith.maximumf %17, %18 : vector<8x128xf32>
      %c0_18 = arith.constant 0 : index
      %c0_19 = arith.constant 0 : index
      %20 = vector.load %arg5[%c0_18, %c0_19] : memref<128x128xf32, #tpu.memory_space<vmem>>, vector<128x128xf32>
      %cst_20 = arith.constant dense<0.000000e+00> : vector<8x128xf32>
      %21 = tpu.matmul %19, %20, %cst_20 {dimension_numbers = #tpu.dot_dimension_numbers<[1], [0], [0], [1], [0, 0, 1, 1], [], []>} : vector<8x128xf32>, vector<128x128xf32>, vector<8x128xf32> -> vector<8x128xf32>
      %c0_21 = arith.constant 0 : index
      %c0_22 = arith.constant 0 : index
      %22 = vector.load %arg6[%c0_21, %c0_22] : memref<1x128xf32, #tpu.memory_space<vmem>>, vector<1x128xf32>
      %23 = vector.broadcast %22 : vector<1x128xf32> to vector<8x128xf32>
      %24 = arith.addf %21, %23 : vector<8x128xf32>
      %c0_23 = arith.constant 0 : index
      %c0_24 = arith.constant 0 : index
      %25 = vector.load %arg7[%c0_23, %c0_24] : memref<8x128xf32, #tpu.memory_space<vmem>>, vector<8x128xf32>
      tpu.vector_store %arg7[%c0_23, %c0_24], %24 {strides = array<i32>} : memref<8x128xf32, #tpu.memory_space<vmem>>, vector<8x128xf32>,
    } else {
    }
    return
  }
  func.func @transform_0(%arg0: i32) -> (i32, i32) {
    %c0_i32 = arith.constant 0 : i32
    %c0_i32_0 = arith.constant 0 : i32
    return %c0_i32, %arg0 : i32, i32
  }
  func.func @transform_1(%arg0: i32) -> (i32, i32) {
    %c0_i32 = arith.constant 0 : i32
    %c0_i32_0 = arith.constant 0 : i32
    return %arg0, %c0_i32 : i32, i32
  }
  func.func @transform_2(%arg0: i32) -> (i32, i32) {
    %c0_i32 = arith.constant 0 : i32
    %c0_i32_0 = arith.constant 0 : i32
    %c0_i32_1 = arith.constant 0 : i32
    return %c0_i32, %c0_i32_0 : i32, i32
  }
  func.func @transform_3(%arg0: i32) -> (i32, i32) {
    %c0_i32 = arith.constant 0 : i32
    %c0_i32_0 = arith.constant 0 : i32
    %c0_i32_1 = arith.constant 0 : i32
    return %c0_i32, %c0_i32_0 : i32, i32
  }
  func.func @transform_4(%arg0: i32) -> (i32, i32) {
    %c0_i32 = arith.constant 0 : i32
    %c0_i32_0 = arith.constant 0 : i32
    %c0_i32_1 = arith.constant 0 : i32
    return %c0_i32, %c0_i32_0 : i32, i32
  }
  func.func @transform_5(%arg0: i32) -> (i32, i32) {
    %c0_i32 = arith.constant 0 : i32
    %c0_i32_0 = arith.constant 0 : i32
    %c0_i32_1 = arith.constant 0 : i32
    return %c0_i32, %c0_i32_0 : i32, i32
  }
  func.func @transform_6(%arg0: i32) -> (i32, i32) {
    %c0_i32 = arith.constant 0 : i32
    %c0_i32_0 = arith.constant 0 : i32
    %c0_i32_1 = arith.constant 0 : i32
    return %c0_i32, %c0_i32_0 : i32, i32
  }
}

</mosaic_0001>

<llo_original>
// kernel: hybrid_gcn_sage.3
$region0: #{hybrid_gcn_sage.3}
  #allocation0 [shape = 'u32[]', space=smem, size = 0x4, offset = 0x4, fixed_abs, tag = 'smem constant byte address 0x4 - core index']
  #allocation1 [shape = 'u32[144,128]{1,0:T(1,128)}', space=vmem, size = 0x12000, scoped, tag = 'internal scratch']
  #allocation2 [shape = 'f32[128,128]{1,0:T(8,128)}', space=vmem, size = 0x10000, scoped, tag = 'scratch operand']
  %s0 = inlined_call_operand.vmem [shape: s8[128,128], index: 0, kind: input, shape index: {}]
  %s1 = inlined_call_operand.vmem [shape: bf16[128,128], index: 1, kind: input, shape index: {}]
  %s2 = inlined_call_operand.vmem [shape: f32[128,1], index: 2, kind: input, shape index: {}]
  %s3 = inlined_call_operand.vmem [shape: f32[1,128], index: 3, kind: input, shape index: {}]
  %s4 = inlined_call_operand.vmem [shape: bf16[128,128], index: 4, kind: output, shape index: {}]
  %s5 = sld [smem:[#allocation0]]
  $region34: #{hybrid_gcn_sage.3} parent=0
    _
  %s7 = ssub.s32 1, %s5
  %s8 = scalar_select 0, %s7, %s5
  // Predicated region
  $region2: #{hybrid_gcn_sage.3} parent=0 // pred_check
    _
  $region3: #{hybrid_gcn_sage.3} parent=0 // pred_check_branch
    %10 = sbr.rel (0) target = $region5
  $region4: #{hybrid_gcn_sage.3} parent=0 // pred_region
    _
  $region5: #{hybrid_gcn_sage.3} parent=0 // pred_fallthru
    _
  // Predicated region
  $region6: #{hybrid_gcn_sage.3} parent=0 // pred_check
    _
  $region7: #{hybrid_gcn_sage.3} parent=0 // pred_check_branch
    %12 = sbr.rel (0) target = $region9
  $region8: #{hybrid_gcn_sage.3} parent=0 // pred_region
    _
  $region9: #{hybrid_gcn_sage.3} parent=0 // pred_fallthru
    _
  // Predicated region
  $region10: #{hybrid_gcn_sage.3} parent=0 // pred_check
    _
  $region11: #{hybrid_gcn_sage.3} parent=0 // pred_check_branch
    %14 = sbr.rel (0) target = $region13
  $region12: #{hybrid_gcn_sage.3} parent=0 // pred_region
    _
  $region13: #{hybrid_gcn_sage.3} parent=0 // pred_fallthru
    _
  // Predicated region
  $region14: #{hybrid_gcn_sage.3} parent=0 // pred_check
    _
  $region15: #{hybrid_gcn_sage.3} parent=0 // pred_check_branch
    %16 = sbr.rel (0) target = $region17
  $region16: #{hybrid_gcn_sage.3} parent=0 // pred_region
    _
  $region17: #{hybrid_gcn_sage.3} parent=0 // pred_fallthru
    _
  %p18 = scmp.eq.s32.totalorder 0, 0
  // Predicated region
  $region18: #{hybrid_gcn_sage.3} parent=0 // pred_check
    %p19 = pneg %p18
  $region19: #{hybrid_gcn_sage.3} parent=0 // pred_check_branch
    %21 = sbr.rel (%p19) target = $region21
  $region20: #{hybrid_gcn_sage.3} parent=0 // pred_region
    %22 = vst [vmem:[#allocation2] sm:$0xff] 0.0
    %23 = vst [vmem:[#allocation2 + $0x8] sm:$0xff] 0.0
    %24 = vst [vmem:[#allocation2 + $0x10] sm:$0xff] 0.0
    %25 = vst [vmem:[#allocation2 + $0x18] sm:$0xff] 0.0
    %26 = vst [vmem:[#allocation2 + $0x20] sm:$0xff] 0.0
    %27 = vst [vmem:[#allocation2 + $0x28] sm:$0xff] 0.0
    %28 = vst [vmem:[#allocation2 + $0x30] sm:$0xff] 0.0
    %29 = vst [vmem:[#allocation2 + $0x38] sm:$0xff] 0.0
    %30 = vst [vmem:[#allocation2 + $0x40] sm:$0xff] 0.0
    %31 = vst [vmem:[#allocation2 + $0x48] sm:$0xff] 0.0
    %32 = vst [vmem:[#allocation2 + $0x50] sm:$0xff] 0.0
    %33 = vst [vmem:[#allocation2 + $0x58] sm:$0xff] 0.0
    %34 = vst [vmem:[#allocation2 + $0x60] sm:$0xff] 0.0
    %35 = vst [vmem:[#allocation2 + $0x68] sm:$0xff] 0.0
    %36 = vst [vmem:[#allocation2 + $0x70] sm:$0xff] 0.0
    %37 = vst [vmem:[#allocation2 + $0x78] sm:$0xff] 0.0
  $region21: #{hybrid_gcn_sage.3} parent=0 // pred_fallthru
    _
  %s38 = smul.u32 0, 128
  %v39 = vld [vmem:[%s0] sm:$0xff]
  %v40 = vld [vmem:[%s0 + $0x8] sm:$0xff]
  %v41 = vld [vmem:[%s0 + $0x10] sm:$0xff]
  %v42 = vld [vmem:[%s0 + $0x18] sm:$0xff]
  %v43 = vunpack.c.l.s8.bf16 %v39
  %v44 = vunpack.c.h.s8.bf16 %v39
  %v45 = vunpack.c.l.s8.bf16 %v40
  %v46 = vunpack.c.h.s8.bf16 %v40
  %v47 = vunpack.c.l.s8.bf16 %v41
  %v48 = vunpack.c.h.s8.bf16 %v41
  %v49 = vunpack.c.l.s8.bf16 %v42
  %v50 = vunpack.c.h.s8.bf16 %v42
  %v51 = vld [vmem:[#allocation2] sm:$0xff]
  %v52 = vld [vmem:[#allocation2 + $0x8] sm:$0xff]
  %v53 = vld [vmem:[#allocation2 + $0x10] sm:$0xff]
  %v54 = vld [vmem:[#allocation2 + $0x18] sm:$0xff]
  %v55 = vld [vmem:[#allocation2 + $0x20] sm:$0xff]
  %v56 = vld [vmem:[#allocation2 + $0x28] sm:$0xff]
  %v57 = vld [vmem:[#allocation2 + $0x30] sm:$0xff]
  %v58 = vld [vmem:[#allocation2 + $0x38] sm:$0xff]
  %v59 = vld [vmem:[#allocation2 + $0x40] sm:$0xff]
  %v60 = vld [vmem:[#allocation2 + $0x48] sm:$0xff]
  %v61 = vld [vmem:[#allocation2 + $0x50] sm:$0xff]
  %v62 = vld [vmem:[#allocation2 + $0x58] sm:$0xff]
  %v63 = vld [vmem:[#allocation2 + $0x60] sm:$0xff]
  %v64 = vld [vmem:[#allocation2 + $0x68] sm:$0xff]
  %v65 = vld [vmem:[#allocation2 + $0x70] sm:$0xff]
  %v66 = vld [vmem:[#allocation2 + $0x78] sm:$0xff]
  %s67 = sshra.s32 %s38, 3
  %s68 = sand.u32 %s38, 7
  %s69 = smul.addr %s67, 4
  %s70 = scalar_lea.vmem %s1, %s69
  %v71 = vld [vmem:[%s70] sm:$0xf]
  %v72 = vld [vmem:[%s70 + $0x4] sm:$0xf]
  %v73 = vld [vmem:[%s70 + $0x8] sm:$0xf]
  %v74 = vld [vmem:[%s70 + $0xc] sm:$0xf]
  %v75 = vld [vmem:[%s70 + $0x10] sm:$0xf]
  %v76 = vld [vmem:[%s70 + $0x14] sm:$0xf]
  %v77 = vld [vmem:[%s70 + $0x18] sm:$0xf]
  %v78 = vld [vmem:[%s70 + $0x1c] sm:$0xf]
  %v79 = vld [vmem:[%s70 + $0x20] sm:$0xf]
  %v80 = vld [vmem:[%s70 + $0x24] sm:$0xf]
  %v81 = vld [vmem:[%s70 + $0x28] sm:$0xf]
  %v82 = vld [vmem:[%s70 + $0x2c] sm:$0xf]
  %v83 = vld [vmem:[%s70 + $0x30] sm:$0xf]
  %v84 = vld [vmem:[%s70 + $0x34] sm:$0xf]
  %v85 = vld [vmem:[%s70 + $0x38] sm:$0xf]
  %v86 = vld [vmem:[%s70 + $0x3c] sm:$0xf]
  %v103 = vunpack.c.l.b16 %v71
  %v104 = vunpack.c.l.b16 %v72
  %v105 = vunpack.c.l.b16 %v73
  %v106 = vunpack.c.l.b16 %v74
  %v107 = vunpack.c.l.b16 %v75
  %v108 = vunpack.c.l.b16 %v76
  %v109 = vunpack.c.l.b16 %v77
  %v110 = vunpack.c.l.b16 %v78
  %v111 = vunpack.c.l.b16 %v79
  %v112 = vunpack.c.l.b16 %v80
  %v113 = vunpack.c.l.b16 %v81
  %v114 = vunpack.c.l.b16 %v82
  %v115 = vunpack.c.l.b16 %v83
  %v116 = vunpack.c.l.b16 %v84
  %v117 = vunpack.c.l.b16 %v85
  %v118 = vunpack.c.l.b16 %v86
  %v119 = vpack.c.b16 %v104, %v103
  %v120 = vpack.c.b16 %v106, %v105
  %v121 = vpack.c.b16 %v108, %v107
  %v122 = vpack.c.b16 %v110, %v109
  %v123 = vpack.c.b16 %v112, %v111
  %v124 = vpack.c.b16 %v114, %v113
  %v125 = vpack.c.b16 %v116, %v115
  %v126 = vpack.c.b16 %v118, %v117
  %135 = vmatprep.subr.bf16.mxu0 0
  %136 = vmatpush1.bf16.msra.mxu0 %v119
  %137 = vmatprep.subr.bf16.mxu0 0
  %138 = vmatpush1.bf16.msra.mxu0 %v120
  %139 = vmatprep.subr.bf16.mxu0 0
  %140 = vmatpush1.bf16.msra.mxu0 %v121
  %141 = vmatprep.subr.bf16.mxu0 0
  %142 = vmatpush1.bf16.msra.mxu0 %v122
  %143 = vmatprep.subr.bf16.mxu0 0
  %144 = vmatpush1.bf16.msra.mxu0 %v123
  %145 = vmatprep.subr.bf16.mxu0 0
  %146 = vmatpush1.bf16.msra.mxu0 %v124
  %147 = vmatprep.subr.bf16.mxu0 0
  %148 = vmatpush1.bf16.msra.mxu0 %v125
  %149 = vmatprep.subr.bf16.mxu0 0
  %150 = vmatpush1.bf16.msra.mxu0 %v126
  %151 = vmatprep.subr.bf16.mxu0 0
  %152 = vmatpush1.bf16.msra.mxu0 0
  %153 = vmatprep.subr.bf16.mxu0 0
  %154 = vmatpush1.bf16.msra.mxu0 0
  %155 = vmatprep.subr.bf16.mxu0 0
  %156 = vmatpush1.bf16.msra.mxu0 0
  %157 = vmatprep.subr.bf16.mxu0 0
  %158 = vmatpush1.bf16.msra.mxu0 0
  %159 = vmatprep.subr.bf16.mxu0 0
  %160 = vmatpush1.bf16.msra.mxu0 0
  %161 = vmatprep.subr.bf16.mxu0 0
  %162 = vmatpush1.bf16.msra.mxu0 0
  %163 = vmatprep.subr.bf16.mxu0 0
  %164 = vmatpush1.bf16.msra.mxu0 0
  %165 = vmatprep.subr.bf16.mxu0 0
  %166 = vmatpush1.bf16.msra.mxu0 0
  %167 = vmatprep.mubr.bf16.mxu0 0
  %168 = vmatmul.mubr.bf16.gmra.mrb[0].mxu0 %v43
  %v169 = vpop.f32.mrb[0].mxu0
  %v170 = vadd.f32 0.0, %v169
  %v171 = vpop.f32.mrb[0].mxu0
  %v172 = vpop.f32.mrb[0].mxu0
  %v173 = vadd.f32 0.0, %v172
  %v174 = vpop.f32.mrb[0].mxu0
  %175 = vmatprep.mubr.bf16.mxu0 0
  %176 = vmatmul.mubr.bf16.gmra.mrb[0].mxu0 %v44
  %v177 = vpop.f32.mrb[0].mxu0
  %v178 = vadd.f32 0.0, %v177
  %v179 = vpop.f32.mrb[0].mxu0
  %v180 = vpop.f32.mrb[0].mxu0
  %v181 = vadd.f32 0.0, %v180
  %v182 = vpop.f32.mrb[0].mxu0
  %183 = vmatprep.mubr.bf16.mxu0 0
  %184 = vmatmul.mubr.bf16.gmra.mrb[0].mxu0 %v45
  %v185 = vpop.f32.mrb[0].mxu0
  %v186 = vadd.f32 0.0, %v185
  %v187 = vpop.f32.mrb[0].mxu0
  %v188 = vpop.f32.mrb[0].mxu0
  %v189 = vadd.f32 0.0, %v188
  %v190 = vpop.f32.mrb[0].mxu0
  %191 = vmatprep.mubr.bf16.mxu0 0
  %192 = vmatmul.mubr.bf16.gmra.mrb[0].mxu0 %v46
  %v193 = vpop.f32.mrb[0].mxu0
  %v194 = vadd.f32 0.0, %v193
  %v195 = vpop.f32.mrb[0].mxu0
  %v196 = vpop.f32.mrb[0].mxu0
  %v197 = vadd.f32 0.0, %v196
  %v198 = vpop.f32.mrb[0].mxu0
  %199 = vmatprep.mubr.bf16.mxu0 0
  %200 = vmatmul.mubr.bf16.gmra.mrb[0].mxu0 %v47
  %v201 = vpop.f32.mrb[0].mxu0
  %v202 = vadd.f32 0.0, %v201
  %v203 = vpop.f32.mrb[0].mxu0
  %v204 = vpop.f32.mrb[0].mxu0
  %v205 = vadd.f32 0.0, %v204
  %v206 = vpop.f32.mrb[0].mxu0
  %207 = vmatprep.mubr.bf16.mxu0 0
  %208 = vmatmul.mubr.bf16.gmra.mrb[0].mxu0 %v48
  %v209 = vpop.f32.mrb[0].mxu0
  %v210 = vadd.f32 0.0, %v209
  %v211 = vpop.f32.mrb[0].mxu0
  %v212 = vpop.f32.mrb[0].mxu0
  %v213 = vadd.f32 0.0, %v212
  %v214 = vpop.f32.mrb[0].mxu0
  %215 = vmatprep.mubr.bf16.mxu0 0
  %216 = vmatmul.mubr.bf16.gmra.mrb[0].mxu0 %v49
  %v217 = vpop.f32.mrb[0].mxu0
  %v218 = vadd.f32 0.0, %v217
  %v219 = vpop.f32.mrb[0].mxu0
  %v220 = vpop.f32.mrb[0].mxu0
  %v221 = vadd.f32 0.0, %v220
  %v222 = vpop.f32.mrb[0].mxu0
  %223 = vmatprep.mubr.bf16.mxu0 0
  %224 = vmatmul.mubr.bf16.gmra.mrb[0].mxu0 %v50
  %v225 = vpop.f32.mrb[0].mxu0
  %v226 = vadd.f32 0.0, %v225
  %v227 = vpop.f32.mrb[0].mxu0
  %v228 = vpop.f32.mrb[0].mxu0
  %v229 = vadd.f32 0.0, %v228
  %v230 = vpop.f32.mrb[0].mxu0
  %231 = vdwg.mxu0
  %v232 = vadd.f32 %v51, %v170
  %v233 = vadd.f32 %v52, %v173
  %v234 = vadd.f32 %v53, %v178
  %v235 = vadd.f32 %v54, %v181
  %v236 = vadd.f32 %v55, %v186
  %v237 = vadd.f32 %v56, %v189
  %v238 = vadd.f32 %v57, %v194
  %v239 = vadd.f32 %v58, %v197
  %v240 = vadd.f32 %v59, %v202
  %v241 = vadd.f32 %v60, %v205
  %v242 = vadd.f32 %v61, %v210
  %v243 = vadd.f32 %v62, %v213
  %v244 = vadd.f32 %v63, %v218
  %v245 = vadd.f32 %v64, %v221
  %v246 = vadd.f32 %v65, %v226
  %v247 = vadd.f32 %v66, %v229
  %248 = vst [vmem:[#allocation2] sm:$0xff] %v232
  %249 = vst [vmem:[#allocation2 + $0x8] sm:$0xff] %v233
  %250 = vst [vmem:[#allocation2 + $0x10] sm:$0xff] %v234
  %251 = vst [vmem:[#allocation2 + $0x18] sm:$0xff] %v235
  %252 = vst [vmem:[#allocation2 + $0x20] sm:$0xff] %v236
  %253 = vst [vmem:[#allocation2 + $0x28] sm:$0xff] %v237
  %254 = vst [vmem:[#allocation2 + $0x30] sm:$0xff] %v238
  %255 = vst [vmem:[#allocation2 + $0x38] sm:$0xff] %v239
  %256 = vst [vmem:[#allocation2 + $0x40] sm:$0xff] %v240
  %257 = vst [vmem:[#allocation2 + $0x48] sm:$0xff] %v241
  %258 = vst [vmem:[#allocation2 + $0x50] sm:$0xff] %v242
  %259 = vst [vmem:[#allocation2 + $0x58] sm:$0xff] %v243
  %260 = vst [vmem:[#allocation2 + $0x60] sm:$0xff] %v244
  %261 = vst [vmem:[#allocation2 + $0x68] sm:$0xff] %v245
  %262 = vst [vmem:[#allocation2 + $0x70] sm:$0xff] %v246
  %263 = vst [vmem:[#allocation2 + $0x78] sm:$0xff] %v247
  // Predicated region
  $region22: #{hybrid_gcn_sage.3} parent=0 // pred_check
    %p264 = pneg %p18
  $region23: #{hybrid_gcn_sage.3} parent=0 // pred_check_branch
    %266 = sbr.rel (%p264) target = $region25
  $region24: #{hybrid_gcn_sage.3} parent=0 // pred_region
    %s267 = smul.u32 0, 128
    %s268 = sshra.s32 %s267, 3
    %s269 = sand.u32 %s267, 7
    %s270 = smul.addr %s268, 4
    %s271 = scalar_lea.vmem %s1, %s270
    %v272 = vld [vmem:[%s271] sm:$0xf]
    %v273 = vld [vmem:[%s271 + $0x4] sm:$0xf]
    %v274 = vld [vmem:[%s271 + $0x8] sm:$0xf]
    %v275 = vld [vmem:[%s271 + $0xc] sm:$0xf]
    %v276 = vld [vmem:[%s271 + $0x10] sm:$0xf]
    %v277 = vld [vmem:[%s271 + $0x14] sm:$0xf]
    %v278 = vld [vmem:[%s271 + $0x18] sm:$0xf]
    %v279 = vld [vmem:[%s271 + $0x1c] sm:$0xf]
    %v280 = vld [vmem:[%s271 + $0x20] sm:$0xf]
    %v281 = vld [vmem:[%s271 + $0x24] sm:$0xf]
    %v282 = vld [vmem:[%s271 + $0x28] sm:$0xf]
    %v283 = vld [vmem:[%s271 + $0x2c] sm:$0xf]
    %v284 = vld [vmem:[%s271 + $0x30] sm:$0xf]
    %v285 = vld [vmem:[%s271 + $0x34] sm:$0xf]
    %v286 = vld [vmem:[%s271 + $0x38] sm:$0xf]
    %v287 = vld [vmem:[%s271 + $0x3c] sm:$0xf]
    %v288 = vunpack.c.l.bf16 %v272
    %v289 = vunpack.c.l.bf16 %v273
    %v290 = vunpack.c.l.bf16 %v274
    %v291 = vunpack.c.l.bf16 %v275
    %v292 = vunpack.c.l.bf16 %v276
    %v293 = vunpack.c.l.bf16 %v277
    %v294 = vunpack.c.l.bf16 %v278
    %v295 = vunpack.c.l.bf16 %v279
    %v296 = vunpack.c.l.bf16 %v280
    %v297 = vunpack.c.l.bf16 %v281
    %v298 = vunpack.c.l.bf16 %v282
    %v299 = vunpack.c.l.bf16 %v283
    %v300 = vunpack.c.l.bf16 %v284
    %v301 = vunpack.c.l.bf16 %v285
    %v302 = vunpack.c.l.bf16 %v286
    %v303 = vunpack.c.l.bf16 %v287
    %v304 = vld [vmem:[%s2] sm:$0xff]
    %v305 = vld [vmem:[%s2 + $0x8] sm:$0xff]
    %v306 = vld [vmem:[%s2 + $0x10] sm:$0xff]
    %v307 = vld [vmem:[%s2 + $0x18] sm:$0xff]
    %v308 = vld [vmem:[%s2 + $0x20] sm:$0xff]
    %v309 = vld [vmem:[%s2 + $0x28] sm:$0xff]
    %v310 = vld [vmem:[%s2 + $0x30] sm:$0xff]
    %v311 = vld [vmem:[%s2 + $0x38] sm:$0xff]
    %v312 = vld [vmem:[%s2 + $0x40] sm:$0xff]
    %v313 = vld [vmem:[%s2 + $0x48] sm:$0xff]
    %v314 = vld [vmem:[%s2 + $0x50] sm:$0xff]
    %v315 = vld [vmem:[%s2 + $0x58] sm:$0xff]
    %v316 = vld [vmem:[%s2 + $0x60] sm:$0xff]
    %v317 = vld [vmem:[%s2 + $0x68] sm:$0xff]
    %v318 = vld [vmem:[%s2 + $0x70] sm:$0xff]
    %v319 = vld [vmem:[%s2 + $0x78] sm:$0xff]
    %v320 = vld [vmem:[#allocation2] sm:$0xff]
    %v321 = vld [vmem:[#allocation2 + $0x8] sm:$0xff]
    %v322 = vld [vmem:[#allocation2 + $0x10] sm:$0xff]
    %v323 = vld [vmem:[#allocation2 + $0x18] sm:$0xff]
    %v324 = vld [vmem:[#allocation2 + $0x20] sm:$0xff]
    %v325 = vld [vmem:[#allocation2 + $0x28] sm:$0xff]
    %v326 = vld [vmem:[#allocation2 + $0x30] sm:$0xff]
    %v327 = vld [vmem:[#allocation2 + $0x38] sm:$0xff]
    %v328 = vld [vmem:[#allocation2 + $0x40] sm:$0xff]
    %v329 = vld [vmem:[#allocation2 + $0x48] sm:$0xff]
    %v330 = vld [vmem:[#allocation2 + $0x50] sm:$0xff]
    %v331 = vld [vmem:[#allocation2 + $0x58] sm:$0xff]
    %v332 = vld [vmem:[#allocation2 + $0x60] sm:$0xff]
    %v333 = vld [vmem:[#allocation2 + $0x68] sm:$0xff]
    %v334 = vld [vmem:[#allocation2 + $0x70] sm:$0xff]
    %v335 = vld [vmem:[#allocation2 + $0x78] sm:$0xff]
    %v336 = vadd.f32 %v320, %v288
    %v337 = vadd.f32 %v321, %v289
    %v338 = vadd.f32 %v322, %v290
    %v339 = vadd.f32 %v323, %v291
    %v340 = vadd.f32 %v324, %v292
    %v341 = vadd.f32 %v325, %v293
    %v342 = vadd.f32 %v326, %v294
    %v343 = vadd.f32 %v327, %v295
    %v344 = vadd.f32 %v328, %v296
    %v345 = vadd.f32 %v329, %v297
    %v346 = vadd.f32 %v330, %v298
    %v347 = vadd.f32 %v331, %v299
    %v348 = vadd.f32 %v332, %v300
    %v349 = vadd.f32 %v333, %v301
    %v350 = vadd.f32 %v334, %v302
    %v351 = vadd.f32 %v335, %v303
    %353 = vset.pattern.permute.xlu0 0
    %354 = vperm.xlu0 %353, %v304
    %v355 = vpop.permute.xlu0 %354
    %358 = vset.pattern.permute.xlu0 0
    %359 = vperm.xlu0 %358, %v305
    %v360 = vpop.permute.xlu0 %359
    %363 = vset.pattern.permute.xlu0 0
    %364 = vperm.xlu0 %363, %v306
    %v365 = vpop.permute.xlu0 %364
    %368 = vset.pattern.permute.xlu0 0
    %369 = vperm.xlu0 %368, %v307
    %v370 = vpop.permute.xlu0 %369
    %373 = vset.pattern.permute.xlu0 0
    %374 = vperm.xlu0 %373, %v308
    %v375 = vpop.permute.xlu0 %374
    %378 = vset.pattern.permute.xlu0 0
    %379 = vperm.xlu0 %378, %v309
    %v380 = vpop.permute.xlu0 %379
    %383 = vset.pattern.permute.xlu0 0
    %384 = vperm.xlu0 %383, %v310
    %v385 = vpop.permute.xlu0 %384
    %388 = vset.pattern.permute.xlu0 0
    %389 = vperm.xlu0 %388, %v311
    %v390 = vpop.permute.xlu0 %389
    %393 = vset.pattern.permute.xlu0 0
    %394 = vperm.xlu0 %393, %v312
    %v395 = vpop.permute.xlu0 %394
    %398 = vset.pattern.permute.xlu0 0
    %399 = vperm.xlu0 %398, %v313
    %v400 = vpop.permute.xlu0 %399
    %403 = vset.pattern.permute.xlu0 0
    %404 = vperm.xlu0 %403, %v314
    %v405 = vpop.permute.xlu0 %404
    %408 = vset.pattern.permute.xlu0 0
    %409 = vperm.xlu0 %408, %v315
    %v410 = vpop.permute.xlu0 %409
    %413 = vset.pattern.permute.xlu0 0
    %414 = vperm.xlu0 %413, %v316
    %v415 = vpop.permute.xlu0 %414
    %418 = vset.pattern.permute.xlu0 0
    %419 = vperm.xlu0 %418, %v317
    %v420 = vpop.permute.xlu0 %419
    %423 = vset.pattern.permute.xlu0 0
    %424 = vperm.xlu0 %423, %v318
    %v425 = vpop.permute.xlu0 %424
    %428 = vset.pattern.permute.xlu0 0
    %429 = vperm.xlu0 %428, %v319
    %v430 = vpop.permute.xlu0 %429
    %v432 = vmul.f32 %v355, %v336
    %v433 = vmul.f32 %v360, %v337
    %v434 = vmul.f32 %v365, %v338
    %v435 = vmul.f32 %v370, %v339
    %v436 = vmul.f32 %v375, %v340
    %v437 = vmul.f32 %v380, %v341
    %v438 = vmul.f32 %v385, %v342
    %v439 = vmul.f32 %v390, %v343
    %v440 = vmul.f32 %v395, %v344
    %v441 = vmul.f32 %v400, %v345
    %v442 = vmul.f32 %v405, %v346
    %v443 = vmul.f32 %v410, %v347
    %v444 = vmul.f32 %v415, %v348
    %v445 = vmul.f32 %v420, %v349
    %v446 = vmul.f32 %v425, %v350
    %v447 = vmul.f32 %v430, %v351
    %v448 = vld [vmem:[%s3] sm:$0x1]
    %v450 = vlaneseq
    %v451 = vshrl.u32 %v450, 7
    %v452 = vsub.s32 0, %v451
    %v453 = vrot.slane %v448, %v452
    %v455 = vadd.f32 %v432, %v453
    %v456 = vadd.f32 %v433, %v453
    %v457 = vadd.f32 %v434, %v453
    %v458 = vadd.f32 %v435, %v453
    %v459 = vadd.f32 %v436, %v453
    %v460 = vadd.f32 %v437, %v453
    %v461 = vadd.f32 %v438, %v453
    %v462 = vadd.f32 %v439, %v453
    %v463 = vadd.f32 %v440, %v453
    %v464 = vadd.f32 %v441, %v453
    %v465 = vadd.f32 %v442, %v453
    %v466 = vadd.f32 %v443, %v453
    %v467 = vadd.f32 %v444, %v453
    %v468 = vadd.f32 %v445, %v453
    %v469 = vadd.f32 %v446, %v453
    %v470 = vadd.f32 %v447, %v453
    %vm471 = vcmp.gt.f32.partialorder %v304, 0.0
    %vm472 = vcmp.gt.f32.partialorder %v305, 0.0
    %vm473 = vcmp.gt.f32.partialorder %v306, 0.0
    %vm474 = vcmp.gt.f32.partialorder %v307, 0.0
    %vm475 = vcmp.gt.f32.partialorder %v308, 0.0
    %vm476 = vcmp.gt.f32.partialorder %v309, 0.0
    %vm477 = vcmp.gt.f32.partialorder %v310, 0.0
    %vm478 = vcmp.gt.f32.partialorder %v311, 0.0
    %vm479 = vcmp.gt.f32.partialorder %v312, 0.0
    %vm480 = vcmp.gt.f32.partialorder %v313, 0.0
    %vm481 = vcmp.gt.f32.partialorder %v314, 0.0
    %vm482 = vcmp.gt.f32.partialorder %v315, 0.0
    %vm483 = vcmp.gt.f32.partialorder %v316, 0.0
    %vm484 = vcmp.gt.f32.partialorder %v317, 0.0
    %vm485 = vcmp.gt.f32.partialorder %v318, 0.0
    %vm486 = vcmp.gt.f32.partialorder %v319, 0.0
    %v487 = vmax.f32 %v455, 0.0
    %v488 = vmax.f32 %v456, 0.0
    %v489 = vmax.f32 %v457, 0.0
    %v490 = vmax.f32 %v458, 0.0
    %v491 = vmax.f32 %v459, 0.0
    %v492 = vmax.f32 %v460, 0.0
    %v493 = vmax.f32 %v461, 0.0
    %v494 = vmax.f32 %v462, 0.0
    %v495 = vmax.f32 %v463, 0.0
    %v496 = vmax.f32 %v464, 0.0
    %v497 = vmax.f32 %v465, 0.0
    %v498 = vmax.f32 %v466, 0.0
    %v499 = vmax.f32 %v467, 0.0
    %v500 = vmax.f32 %v468, 0.0
    %v501 = vmax.f32 %v469, 0.0
    %v502 = vmax.f32 %v470, 0.0
    %v503 = vsel %vm471, 1, 0
    %v504 = vsel %vm472, 1, 0
    %v505 = vsel %vm473, 1, 0
    %v506 = vsel %vm474, 1, 0
    %v507 = vsel %vm475, 1, 0
    %v508 = vsel %vm476, 1, 0
    %v509 = vsel %vm477, 1, 0
    %v510 = vsel %vm478, 1, 0
    %v511 = vsel %vm479, 1, 0
    %v512 = vsel %vm480, 1, 0
    %v513 = vsel %vm481, 1, 0
    %v514 = vsel %vm482, 1, 0
    %v515 = vsel %vm483, 1, 0
    %v516 = vsel %vm484, 1, 0
    %v517 = vsel %vm485, 1, 0
    %v518 = vsel %vm486, 1, 0
    %519 = vset.pattern.permute.xlu0 0
    %520 = vperm.xlu0 %519, %v503
    %v521 = vpop.permute.xlu0 %520
    %522 = vset.pattern.permute.xlu0 0
    %523 = vperm.xlu0 %522, %v504
    %v524 = vpop.permute.xlu0 %523
    %525 = vset.pattern.permute.xlu0 0
    %526 = vperm.xlu0 %525, %v505
    %v527 = vpop.permute.xlu0 %526
    %528 = vset.pattern.permute.xlu0 0
    %529 = vperm.xlu0 %528, %v506
    %v530 = vpop.permute.xlu0 %529
    %531 = vset.pattern.permute.xlu0 0
    %532 = vperm.xlu0 %531, %v507
    %v533 = vpop.permute.xlu0 %532
    %534 = vset.pattern.permute.xlu0 0
    %535 = vperm.xlu0 %534, %v508
    %v536 = vpop.permute.xlu0 %535
    %537 = vset.pattern.permute.xlu0 0
    %538 = vperm.xlu0 %537, %v509
    %v539 = vpop.permute.xlu0 %538
    %540 = vset.pattern.permute.xlu0 0
    %541 = vperm.xlu0 %540, %v510
    %v542 = vpop.permute.xlu0 %541
    %543 = vset.pattern.permute.xlu0 0
    %544 = vperm.xlu0 %543, %v511
    %v545 = vpop.permute.xlu0 %544
    %546 = vset.pattern.permute.xlu0 0
    %547 = vperm.xlu0 %546, %v512
    %v548 = vpop.permute.xlu0 %547
    %549 = vset.pattern.permute.xlu0 0
    %550 = vperm.xlu0 %549, %v513
    %v551 = vpop.permute.xlu0 %550
    %552 = vset.pattern.permute.xlu0 0
    %553 = vperm.xlu0 %552, %v514
    %v554 = vpop.permute.xlu0 %553
    %555 = vset.pattern.permute.xlu0 0
    %556 = vperm.xlu0 %555, %v515
    %v557 = vpop.permute.xlu0 %556
    %558 = vset.pattern.permute.xlu0 0
    %559 = vperm.xlu0 %558, %v516
    %v560 = vpop.permute.xlu0 %559
    %561 = vset.pattern.permute.xlu0 0
    %562 = vperm.xlu0 %561, %v517
    %v563 = vpop.permute.xlu0 %562
    %564 = vset.pattern.permute.xlu0 0
    %565 = vperm.xlu0 %564, %v518
    %v566 = vpop.permute.xlu0 %565
    %vm567 = vcmp.eq.s32.totalorder %v521, 1
    %vm568 = vcmp.eq.s32.totalorder %v524, 1
    %vm569 = vcmp.eq.s32.totalorder %v527, 1
    %vm570 = vcmp.eq.s32.totalorder %v530, 1
    %vm571 = vcmp.eq.s32.totalorder %v533, 1
    %vm572 = vcmp.eq.s32.totalorder %v536, 1
    %vm573 = vcmp.eq.s32.totalorder %v539, 1
    %vm574 = vcmp.eq.s32.totalorder %v542, 1
    %vm575 = vcmp.eq.s32.totalorder %v545, 1
    %vm576 = vcmp.eq.s32.totalorder %v548, 1
    %vm577 = vcmp.eq.s32.totalorder %v551, 1
    %vm578 = vcmp.eq.s32.totalorder %v554, 1
    %vm579 = vcmp.eq.s32.totalorder %v557, 1
    %vm580 = vcmp.eq.s32.totalorder %v560, 1
    %vm581 = vcmp.eq.s32.totalorder %v563, 1
    %vm582 = vcmp.eq.s32.totalorder %v566, 1
    %v583 = vsel %vm567, %v487, 0.0
    %v584 = vsel %vm568, %v488, 0.0
    %v585 = vsel %vm569, %v489, 0.0
    %v586 = vsel %vm570, %v490, 0.0
    %v587 = vsel %vm571, %v491, 0.0
    %v588 = vsel %vm572, %v492, 0.0
    %v589 = vsel %vm573, %v493, 0.0
    %v590 = vsel %vm574, %v494, 0.0
    %v591 = vsel %vm575, %v495, 0.0
    %v592 = vsel %vm576, %v496, 0.0
    %v593 = vsel %vm577, %v497, 0.0
    %v594 = vsel %vm578, %v498, 0.0
    %v595 = vsel %vm579, %v499, 0.0
    %v596 = vsel %vm580, %v500, 0.0
    %v597 = vsel %vm581, %v501, 0.0
    %v598 = vsel %vm582, %v502, 0.0
    %v599 = vpack.c.bf16 %v584, %v583
    %v600 = vpack.c.bf16 %v586, %v585
    %v601 = vpack.c.bf16 %v588, %v587
    %v602 = vpack.c.bf16 %v590, %v589
    %v603 = vpack.c.bf16 %v592, %v591
    %v604 = vpack.c.bf16 %v594, %v593
    %v605 = vpack.c.bf16 %v596, %v595
    %v606 = vpack.c.bf16 %v598, %v597
    %v615 = vunpack.c.l.b16 %v599
    %v616 = vunpack.c.h.b16 %v599
    %v617 = vunpack.c.l.b16 %v600
    %v618 = vunpack.c.h.b16 %v600
    %v619 = vunpack.c.l.b16 %v601
    %v620 = vunpack.c.h.b16 %v601
    %v621 = vunpack.c.l.b16 %v602
    %v622 = vunpack.c.h.b16 %v602
    %v623 = vunpack.c.l.b16 %v603
    %v624 = vunpack.c.h.b16 %v603
    %v625 = vunpack.c.l.b16 %v604
    %v626 = vunpack.c.h.b16 %v604
    %v627 = vunpack.c.l.b16 %v605
    %v628 = vunpack.c.h.b16 %v605
    %v629 = vunpack.c.l.b16 %v606
    %v630 = vunpack.c.h.b16 %v606
    %v631 = vpack.c.b16 %v615, %v615
    %v632 = vpack.c.b16 %v616, %v616
    %v633 = vpack.c.b16 %v617, %v617
    %v634 = vpack.c.b16 %v618, %v618
    %v635 = vpack.c.b16 %v619, %v619
    %v636 = vpack.c.b16 %v620, %v620
    %v637 = vpack.c.b16 %v621, %v621
    %v638 = vpack.c.b16 %v622, %v622
    %v639 = vpack.c.b16 %v623, %v623
    %v640 = vpack.c.b16 %v624, %v624
    %v641 = vpack.c.b16 %v625, %v625
    %v642 = vpack.c.b16 %v626, %v626
    %v643 = vpack.c.b16 %v627, %v627
    %v644 = vpack.c.b16 %v628, %v628
    %v645 = vpack.c.b16 %v629, %v629
    %v646 = vpack.c.b16 %v630, %v630
    %663 = vst [vmem:[%s4] sm:$0xf] %v631
    %664 = vst [vmem:[%s4 + $0x4] sm:$0xf] %v632
    %665 = vst [vmem:[%s4 + $0x8] sm:$0xf] %v633
    %666 = vst [vmem:[%s4 + $0xc] sm:$0xf] %v634
    %667 = vst [vmem:[%s4 + $0x10] sm:$0xf] %v635
    %668 = vst [vmem:[%s4 + $0x14] sm:$0xf] %v636
    %669 = vst [vmem:[%s4 + $0x18] sm:$0xf] %v637
    %670 = vst [vmem:[%s4 + $0x1c] sm:$0xf] %v638
    %671 = vst [vmem:[%s4 + $0x20] sm:$0xf] %v639
    %672 = vst [vmem:[%s4 + $0x24] sm:$0xf] %v640
    %673 = vst [vmem:[%s4 + $0x28] sm:$0xf] %v641
    %674 = vst [vmem:[%s4 + $0x2c] sm:$0xf] %v642
    %675 = vst [vmem:[%s4 + $0x30] sm:$0xf] %v643
    %676 = vst [vmem:[%s4 + $0x34] sm:$0xf] %v644
    %677 = vst [vmem:[%s4 + $0x38] sm:$0xf] %v645
    %678 = vst [vmem:[%s4 + $0x3c] sm:$0xf] %v646
  $region25: #{hybrid_gcn_sage.3} parent=0 // pred_fallthru
    _
  // Predicated region
  $region26: #{hybrid_gcn_sage.3} parent=0 // pred_check
    _
  $region27: #{hybrid_gcn_sage.3} parent=0 // pred_check_branch
    %680 = sbr.rel (0) target = $region29
  $region28: #{hybrid_gcn_sage.3} parent=0 // pred_region
    _
  $region29: #{hybrid_gcn_sage.3} parent=0 // pred_fallthru
    _
  // Predicated region
  $region30: #{hybrid_gcn_sage.3} parent=0 // pred_check
    _
  $region31: #{hybrid_gcn_sage.3} parent=0 // pred_check_branch
    %682 = sbr.rel (0) target = $region33
  $region32: #{hybrid_gcn_sage.3} parent=0 // pred_region
    _
  $region33: #{hybrid_gcn_sage.3} parent=0 // pred_fallthru
    _

// kernel: hybrid_gcn_sage.5
$region0: #{hybrid_gcn_sage.5}
  #allocation0 [shape = 'u32[]', space=smem, size = 0x4, offset = 0x4, fixed_abs, tag = 'smem constant byte address 0x4 - core index']
  #allocation1 [shape = 'u32[144,128]{1,0:T(1,128)}', space=vmem, size = 0x12000, scoped, tag = 'internal scratch']
  #allocation2 [shape = 'f32[8,128]{1,0:T(8,128)}', space=vmem, size = 0x1000, scoped, tag = 'scratch operand']
  %s0 = inlined_call_operand.vmem [shape: bf16[8,128], index: 0, kind: input, shape index: {}]
  %s1 = inlined_call_operand.vmem [shape: bf16[128,128], index: 1, kind: input, shape index: {}]
  %s2 = inlined_call_operand.vmem [shape: f32[128,128], index: 2, kind: input, shape index: {}]
  %s3 = inlined_call_operand.vmem [shape: f32[1,128], index: 3, kind: input, shape index: {}]
  %s4 = inlined_call_operand.vmem [shape: f32[128,128], index: 4, kind: input, shape index: {}]
  %s5 = inlined_call_operand.vmem [shape: f32[1,128], index: 5, kind: input, shape index: {}]
  %s6 = inlined_call_operand.vmem [shape: f32[8,128], index: 6, kind: output, shape index: {}]
  %s7 = sld [smem:[#allocation0]]
  $region42: #{hybrid_gcn_sage.5} parent=0
    _
  %s9 = ssub.s32 1, %s7
  %s10 = scalar_select 0, %s9, %s7
  // Predicated region
  $region2: #{hybrid_gcn_sage.5} parent=0 // pred_check
    _
  $region3: #{hybrid_gcn_sage.5} parent=0 // pred_check_branch
    %12 = sbr.rel (0) target = $region5
  $region4: #{hybrid_gcn_sage.5} parent=0 // pred_region
    _
  $region5: #{hybrid_gcn_sage.5} parent=0 // pred_fallthru
    _
  // Predicated region
  $region6: #{hybrid_gcn_sage.5} parent=0 // pred_check
    _
  $region7: #{hybrid_gcn_sage.5} parent=0 // pred_check_branch
    %14 = sbr.rel (0) target = $region9
  $region8: #{hybrid_gcn_sage.5} parent=0 // pred_region
    _
  $region9: #{hybrid_gcn_sage.5} parent=0 // pred_fallthru
    _
  // Predicated region
  $region10: #{hybrid_gcn_sage.5} parent=0 // pred_check
    _
  $region11: #{hybrid_gcn_sage.5} parent=0 // pred_check_branch
    %16 = sbr.rel (0) target = $region13
  $region12: #{hybrid_gcn_sage.5} parent=0 // pred_region
    _
  $region13: #{hybrid_gcn_sage.5} parent=0 // pred_fallthru
    _
  // Predicated region
  $region14: #{hybrid_gcn_sage.5} parent=0 // pred_check
    _
  $region15: #{hybrid_gcn_sage.5} parent=0 // pred_check_branch
    %18 = sbr.rel (0) target = $region17
  $region16: #{hybrid_gcn_sage.5} parent=0 // pred_region
    _
  $region17: #{hybrid_gcn_sage.5} parent=0 // pred_fallthru
    _
  // Predicated region
  $region18: #{hybrid_gcn_sage.5} parent=0 // pred_check
    _
  $region19: #{hybrid_gcn_sage.5} parent=0 // pred_check_branch
    %20 = sbr.rel (0) target = $region21
  $region20: #{hybrid_gcn_sage.5} parent=0 // pred_region
    _
  $region21: #{hybrid_gcn_sage.5} parent=0 // pred_fallthru
    _
  // Predicated region
  $region22: #{hybrid_gcn_sage.5} parent=0 // pred_check
    _
  $region23: #{hybrid_gcn_sage.5} parent=0 // pred_check_branch
    %22 = sbr.rel (0) target = $region25
  $region24: #{hybrid_gcn_sage.5} parent=0 // pred_region
    _
  $region25: #{hybrid_gcn_sage.5} parent=0 // pred_fallthru
    _
  %p24 = scmp.eq.s32.totalorder 0, 0
  // Predicated region
  $region26: #{hybrid_gcn_sage.5} parent=0 // pred_check
    %p25 = pneg %p24
  $region27: #{hybrid_gcn_sage.5} parent=0 // pred_check_branch
    %27 = sbr.rel (%p25) target = $region29
  $region28: #{hybrid_gcn_sage.5} parent=0 // pred_region
    %28 = vst [vmem:[#allocation2] sm:$0xff] 0.0
  $region29: #{hybrid_gcn_sage.5} parent=0 // pred_fallthru
    _
  %v29 = vld [vmem:[#allocation2] sm:$0xff]
  %v30 = vld [vmem:[%s0] sm:$0xf]
  %v31 = vld [vmem:[%s1] sm:$0xf]
  %v32 = vld [vmem:[%s1 + $0x4] sm:$0xf]
  %v33 = vld [vmem:[%s1 + $0x8] sm:$0xf]
  %v34 = vld [vmem:[%s1 + $0xc] sm:$0xf]
  %v35 = vld [vmem:[%s1 + $0x10] sm:$0xf]
  %v36 = vld [vmem:[%s1 + $0x14] sm:$0xf]
  %v37 = vld [vmem:[%s1 + $0x18] sm:$0xf]
  %v38 = vld [vmem:[%s1 + $0x1c] sm:$0xf]
  %v39 = vld [vmem:[%s1 + $0x20] sm:$0xf]
  %v40 = vld [vmem:[%s1 + $0x24] sm:$0xf]
  %v41 = vld [vmem:[%s1 + $0x28] sm:$0xf]
  %v42 = vld [vmem:[%s1 + $0x2c] sm:$0xf]
  %v43 = vld [vmem:[%s1 + $0x30] sm:$0xf]
  %v44 = vld [vmem:[%s1 + $0x34] sm:$0xf]
  %v45 = vld [vmem:[%s1 + $0x38] sm:$0xf]
  %v46 = vld [vmem:[%s1 + $0x3c] sm:$0xf]
  %v63 = vunpack.c.l.b16 %v31
  %v64 = vunpack.c.l.b16 %v32
  %v65 = vunpack.c.l.b16 %v33
  %v66 = vunpack.c.l.b16 %v34
  %v67 = vunpack.c.l.b16 %v35
  %v68 = vunpack.c.l.b16 %v36
  %v69 = vunpack.c.l.b16 %v37
  %v70 = vunpack.c.l.b16 %v38
  %v71 = vunpack.c.l.b16 %v39
  %v72 = vunpack.c.l.b16 %v40
  %v73 = vunpack.c.l.b16 %v41
  %v74 = vunpack.c.l.b16 %v42
  %v75 = vunpack.c.l.b16 %v43
  %v76 = vunpack.c.l.b16 %v44
  %v77 = vunpack.c.l.b16 %v45
  %v78 = vunpack.c.l.b16 %v46
  %v79 = vpack.c.b16 %v64, %v63
  %v80 = vpack.c.b16 %v66, %v65
  %v81 = vpack.c.b16 %v68, %v67
  %v82 = vpack.c.b16 %v70, %v69
  %v83 = vpack.c.b16 %v72, %v71
  %v84 = vpack.c.b16 %v74, %v73
  %v85 = vpack.c.b16 %v76, %v75
  %v86 = vpack.c.b16 %v78, %v77
  %95 = vmatprep.subr.bf16.mxu0 0
  %96 = vmatpush1.bf16.msra.mxu0 %v79
  %97 = vmatprep.subr.bf16.mxu0 0
  %98 = vmatpush1.bf16.msra.mxu0 %v80
  %99 = vmatprep.subr.bf16.mxu0 0
  %100 = vmatpush1.bf16.msra.mxu0 %v81
  %101 = vmatprep.subr.bf16.mxu0 0
  %102 = vmatpush1.bf16.msra.mxu0 %v82
  %103 = vmatprep.subr.bf16.mxu0 0
  %104 = vmatpush1.bf16.msra.mxu0 %v83
  %105 = vmatprep.subr.bf16.mxu0 0
  %106 = vmatpush1.bf16.msra.mxu0 %v84
  %107 = vmatprep.subr.bf16.mxu0 0
  %108 = vmatpush1.bf16.msra.mxu0 %v85
  %109 = vmatprep.subr.bf16.mxu0 0
  %110 = vmatpush1.bf16.msra.mxu0 %v86
  %111 = vmatprep.subr.bf16.mxu0 0
  %112 = vmatpush1.bf16.msra.mxu0 0
  %113 = vmatprep.subr.bf16.mxu0 0
  %114 = vmatpush1.bf16.msra.mxu0 0
  %115 = vmatprep.subr.bf16.mxu0 0
  %116 = vmatpush1.bf16.msra.mxu0 0
  %117 = vmatprep.subr.bf16.mxu0 0
  %118 = vmatpush1.bf16.msra.mxu0 0
  %119 = vmatprep.subr.bf16.mxu0 0
  %120 = vmatpush1.bf16.msra.mxu0 0
  %121 = vmatprep.subr.bf16.mxu0 0
  %122 = vmatpush1.bf16.msra.mxu0 0
  %123 = vmatprep.subr.bf16.mxu0 0
  %124 = vmatpush1.bf16.msra.mxu0 0
  %125 = vmatprep.subr.bf16.mxu0 0
  %126 = vmatpush1.bf16.msra.mxu0 0
  %127 = vmatprep.mubr.bf16.mxu0 0
  %128 = vmatmul.mubr.bf16.gmra.mrb[0].mxu0 %v30
  %v129 = vpop.f32.mrb[0].mxu0
  %v130 = vadd.f32 0.0, %v129
  %v131 = vpop.f32.mrb[0].mxu0
  %v132 = vpop.f32.mrb[0].mxu0
  %v133 = vpop.f32.mrb[0].mxu0
  %134 = vdwg.mxu0
  %v135 = vadd.f32 %v29, %v130
  %136 = vst [vmem:[#allocation2] sm:$0xff] %v135
  // Predicated region
  $region30: #{hybrid_gcn_sage.5} parent=0 // pred_check
    %p137 = pneg %p24
  $region31: #{hybrid_gcn_sage.5} parent=0 // pred_check_branch
    %139 = sbr.rel (%p137) target = $region33
  $region32: #{hybrid_gcn_sage.5} parent=0 // pred_region
    %v140 = vld [vmem:[#allocation2] sm:$0xff]
    %v141 = vld [vmem:[%s2] sm:$0xff]
    %v142 = vld [vmem:[%s2 + $0x8] sm:$0xff]
    %v143 = vld [vmem:[%s2 + $0x10] sm:$0xff]
    %v144 = vld [vmem:[%s2 + $0x18] sm:$0xff]
    %v145 = vld [vmem:[%s2 + $0x20] sm:$0xff]
    %v146 = vld [vmem:[%s2 + $0x28] sm:$0xff]
    %v147 = vld [vmem:[%s2 + $0x30] sm:$0xff]
    %v148 = vld [vmem:[%s2 + $0x38] sm:$0xff]
    %v149 = vld [vmem:[%s2 + $0x40] sm:$0xff]
    %v150 = vld [vmem:[%s2 + $0x48] sm:$0xff]
    %v151 = vld [vmem:[%s2 + $0x50] sm:$0xff]
    %v152 = vld [vmem:[%s2 + $0x58] sm:$0xff]
    %v153 = vld [vmem:[%s2 + $0x60] sm:$0xff]
    %v154 = vld [vmem:[%s2 + $0x68] sm:$0xff]
    %v155 = vld [vmem:[%s2 + $0x70] sm:$0xff]
    %v156 = vld [vmem:[%s2 + $0x78] sm:$0xff]
    %v157 = vld [vmem:[%s3] sm:$0x1]
    %v159 = vlaneseq
    %v160 = vshrl.u32 %v159, 7
    %v161 = vsub.s32 0, %v160
    %v162 = vrot.slane %v157, %v161
    %164 = vmatprep.subr.mxu0 0.0
    %165 = vmatpush1.msra.mxu0 %v141
    %166 = vmatprep.subr.mxu0 0.0
    %167 = vmatpush1.msra.mxu0 %v142
    %168 = vmatprep.subr.mxu0 0.0
    %169 = vmatpush1.msra.mxu0 %v143
    %170 = vmatprep.subr.mxu0 0.0
    %171 = vmatpush1.msra.mxu0 %v144
    %172 = vmatprep.subr.mxu0 0.0
    %173 = vmatpush1.msra.mxu0 %v145
    %174 = vmatprep.subr.mxu0 0.0
    %175 = vmatpush1.msra.mxu0 %v146
    %176 = vmatprep.subr.mxu0 0.0
    %177 = vmatpush1.msra.mxu0 %v147
    %178 = vmatprep.subr.mxu0 0.0
    %179 = vmatpush1.msra.mxu0 %v148
    %180 = vmatprep.subr.mxu0 0.0
    %181 = vmatpush1.msra.mxu0 %v149
    %182 = vmatprep.subr.mxu0 0.0
    %183 = vmatpush1.msra.mxu0 %v150
    %184 = vmatprep.subr.mxu0 0.0
    %185 = vmatpush1.msra.mxu0 %v151
    %186 = vmatprep.subr.mxu0 0.0
    %187 = vmatpush1.msra.mxu0 %v152
    %188 = vmatprep.subr.mxu0 0.0
    %189 = vmatpush1.msra.mxu0 %v153
    %190 = vmatprep.subr.mxu0 0.0
    %191 = vmatpush1.msra.mxu0 %v154
    %192 = vmatprep.subr.mxu0 0.0
    %193 = vmatpush1.msra.mxu0 %v155
    %194 = vmatprep.subr.mxu0 0.0
    %195 = vmatpush1.msra.mxu0 %v156
    %196 = vmatprep.subr.mxu0 0.0
    %197 = vmatpush1.msra.mxu0 0.0
    %198 = vmatprep.subr.mxu0 0.0
    %199 = vmatpush1.msra.mxu0 0.0
    %200 = vmatprep.subr.mxu0 0.0
    %201 = vmatpush1.msra.mxu0 0.0
    %202 = vmatprep.subr.mxu0 0.0
    %203 = vmatpush1.msra.mxu0 0.0
    %204 = vmatprep.subr.mxu0 0.0
    %205 = vmatpush1.msra.mxu0 0.0
    %206 = vmatprep.subr.mxu0 0.0
    %207 = vmatpush1.msra.mxu0 0.0
    %208 = vmatprep.subr.mxu0 0.0
    %209 = vmatpush1.msra.mxu0 0.0
    %210 = vmatprep.subr.mxu0 0.0
    %211 = vmatpush1.msra.mxu0 0.0
    %212 = vmatprep.subr.mxu0 0.0
    %213 = vmatpush1.msra.mxu0 0.0
    %214 = vmatprep.subr.mxu0 0.0
    %215 = vmatpush1.msra.mxu0 0.0
    %216 = vmatprep.subr.mxu0 0.0
    %217 = vmatpush1.msra.mxu0 0.0
    %218 = vmatprep.subr.mxu0 0.0
    %219 = vmatpush1.msra.mxu0 0.0
    %220 = vmatprep.subr.mxu0 0.0
    %221 = vmatpush1.msra.mxu0 0.0
    %222 = vmatprep.subr.mxu0 0.0
    %223 = vmatpush1.msra.mxu0 0.0
    %224 = vmatprep.subr.mxu0 0.0
    %225 = vmatpush1.msra.mxu0 0.0
    %226 = vmatprep.subr.mxu0 0.0
    %227 = vmatpush1.msra.mxu0 0.0
    %228 = vmatprep.mubr.f32.mxu0 0.0
    %229 = vmatmul.mubr.f32.gmra.mrb[0].mxu0 %v140
    %v230 = vpop.f32.mrb[0].mxu0
    %v231 = vadd.f32 %v162, %v230
    %v232 = vpop.f32.mrb[0].mxu0
    %233 = vdwg.mxu0
    %v234 = vmax.f32 %v231, 0.0
    %v235 = vld [vmem:[%s4] sm:$0xff]
    %v236 = vld [vmem:[%s4 + $0x8] sm:$0xff]
    %v237 = vld [vmem:[%s4 + $0x10] sm:$0xff]
    %v238 = vld [vmem:[%s4 + $0x18] sm:$0xff]
    %v239 = vld [vmem:[%s4 + $0x20] sm:$0xff]
    %v240 = vld [vmem:[%s4 + $0x28] sm:$0xff]
    %v241 = vld [vmem:[%s4 + $0x30] sm:$0xff]
    %v242 = vld [vmem:[%s4 + $0x38] sm:$0xff]
    %v243 = vld [vmem:[%s4 + $0x40] sm:$0xff]
    %v244 = vld [vmem:[%s4 + $0x48] sm:$0xff]
    %v245 = vld [vmem:[%s4 + $0x50] sm:$0xff]
    %v246 = vld [vmem:[%s4 + $0x58] sm:$0xff]
    %v247 = vld [vmem:[%s4 + $0x60] sm:$0xff]
    %v248 = vld [vmem:[%s4 + $0x68] sm:$0xff]
    %v249 = vld [vmem:[%s4 + $0x70] sm:$0xff]
    %v250 = vld [vmem:[%s4 + $0x78] sm:$0xff]
    %v251 = vld [vmem:[%s5] sm:$0x1]
    %v253 = vlaneseq
    %v254 = vshrl.u32 %v253, 7
    %v255 = vsub.s32 0, %v254
    %v256 = vrot.slane %v251, %v255
    %258 = vmatprep.subr.mxu0 0.0
    %259 = vmatpush1.msra.mxu0 %v235
    %260 = vmatprep.subr.mxu0 0.0
    %261 = vmatpush1.msra.mxu0 %v236
    %262 = vmatprep.subr.mxu0 0.0
    %263 = vmatpush1.msra.mxu0 %v237
    %264 = vmatprep.subr.mxu0 0.0
    %265 = vmatpush1.msra.mxu0 %v238
    %266 = vmatprep.subr.mxu0 0.0
    %267 = vmatpush1.msra.mxu0 %v239
    %268 = vmatprep.subr.mxu0 0.0
    %269 = vmatpush1.msra.mxu0 %v240
    %270 = vmatprep.subr.mxu0 0.0
    %271 = vmatpush1.msra.mxu0 %v241
    %272 = vmatprep.subr.mxu0 0.0
    %273 = vmatpush1.msra.mxu0 %v242
    %274 = vmatprep.subr.mxu0 0.0
    %275 = vmatpush1.msra.mxu0 %v243
    %276 = vmatprep.subr.mxu0 0.0
    %277 = vmatpush1.msra.mxu0 %v244
    %278 = vmatprep.subr.mxu0 0.0
    %279 = vmatpush1.msra.mxu0 %v245
    %280 = vmatprep.subr.mxu0 0.0
    %281 = vmatpush1.msra.mxu0 %v246
    %282 = vmatprep.subr.mxu0 0.0
    %283 = vmatpush1.msra.mxu0 %v247
    %284 = vmatprep.subr.mxu0 0.0
    %285 = vmatpush1.msra.mxu0 %v248
    %286 = vmatprep.subr.mxu0 0.0
    %287 = vmatpush1.msra.mxu0 %v249
    %288 = vmatprep.subr.mxu0 0.0
    %289 = vmatpush1.msra.mxu0 %v250
    %290 = vmatprep.subr.mxu0 0.0
    %291 = vmatpush1.msra.mxu0 0.0
    %292 = vmatprep.subr.mxu0 0.0
    %293 = vmatpush1.msra.mxu0 0.0
    %294 = vmatprep.subr.mxu0 0.0
    %295 = vmatpush1.msra.mxu0 0.0
    %296 = vmatprep.subr.mxu0 0.0
    %297 = vmatpush1.msra.mxu0 0.0
    %298 = vmatprep.subr.mxu0 0.0
    %299 = vmatpush1.msra.mxu0 0.0
    %300 = vmatprep.subr.mxu0 0.0
    %301 = vmatpush1.msra.mxu0 0.0
    %302 = vmatprep.subr.mxu0 0.0
    %303 = vmatpush1.msra.mxu0 0.0
    %304 = vmatprep.subr.mxu0 0.0
    %305 = vmatpush1.msra.mxu0 0.0
    %306 = vmatprep.subr.mxu0 0.0
    %307 = vmatpush1.msra.mxu0 0.0
    %308 = vmatprep.subr.mxu0 0.0
    %309 = vmatpush1.msra.mxu0 0.0
    %310 = vmatprep.subr.mxu0 0.0
    %311 = vmatpush1.msra.mxu0 0.0
    %312 = vmatprep.subr.mxu0 0.0
    %313 = vmatpush1.msra.mxu0 0.0
    %314 = vmatprep.subr.mxu0 0.0
    %315 = vmatpush1.msra.mxu0 0.0
    %316 = vmatprep.subr.mxu0 0.0
    %317 = vmatpush1.msra.mxu0 0.0
    %318 = vmatprep.subr.mxu0 0.0
    %319 = vmatpush1.msra.mxu0 0.0
    %320 = vmatprep.subr.mxu0 0.0
    %321 = vmatpush1.msra.mxu0 0.0
    %322 = vmatprep.mubr.f32.mxu0 0.0
    %323 = vmatmul.mubr.f32.gmra.mrb[0].mxu0 %v234
    %v324 = vpop.f32.mrb[0].mxu0
    %v325 = vadd.f32 %v256, %v324
    %v326 = vpop.f32.mrb[0].mxu0
    %327 = vdwg.mxu0
    %328 = vst [vmem:[%s6] sm:$0xff] %v325
  $region33: #{hybrid_gcn_sage.5} parent=0 // pred_fallthru
    _
  // Predicated region
  $region34: #{hybrid_gcn_sage.5} parent=0 // pred_check
    _
  $region35: #{hybrid_gcn_sage.5} parent=0 // pred_check_branch
    %330 = sbr.rel (0) target = $region37
  $region36: #{hybrid_gcn_sage.5} parent=0 // pred_region
    _
  $region37: #{hybrid_gcn_sage.5} parent=0 // pred_fallthru
    _
  // Predicated region
  $region38: #{hybrid_gcn_sage.5} parent=0 // pred_check
    _
  $region39: #{hybrid_gcn_sage.5} parent=0 // pred_check_branch
    %332 = sbr.rel (0) target = $region41
  $region40: #{hybrid_gcn_sage.5} parent=0 // pred_region
    _
  $region41: #{hybrid_gcn_sage.5} parent=0 // pred_fallthru
    _

// kernel: hybrid_gcn_sage.4
$region0: #{hybrid_gcn_sage.4}
  #allocation0 [shape = 'u32[]', space=smem, size = 0x4, offset = 0x4, fixed_abs, tag = 'smem constant byte address 0x4 - core index']
  #allocation1 [shape = 'u32[144,128]{1,0:T(1,128)}', space=vmem, size = 0x12000, scoped, tag = 'internal scratch']
  #allocation2 [shape = 'f32[128,128]{1,0:T(8,128)}', space=vmem, size = 0x10000, scoped, tag = 'scratch operand']
  %s0 = inlined_call_operand.vmem [shape: s8[128,128], index: 0, kind: input, shape index: {}]
  %s1 = inlined_call_operand.vmem [shape: bf16[128,128], index: 1, kind: input, shape index: {}]
  %s2 = inlined_call_operand.vmem [shape: f32[128,1], index: 2, kind: input, shape index: {}]
  %s3 = inlined_call_operand.vmem [shape: f32[128,1], index: 3, kind: input, shape index: {}]
  %s4 = inlined_call_operand.vmem [shape: f32[128,128], index: 4, kind: input, shape index: {}]
  %s5 = inlined_call_operand.vmem [shape: f32[1,128], index: 5, kind: input, shape index: {}]
  %s6 = inlined_call_operand.vmem [shape: f32[128,128], index: 6, kind: input, shape index: {}]
  %s7 = inlined_call_operand.vmem [shape: bf16[128,128], index: 7, kind: output, shape index: {}]
  %s8 = sld [smem:[#allocation0]]
  $region46: #{hybrid_gcn_sage.4} parent=0
    _
  %s10 = ssub.s32 1, %s8
  %s11 = scalar_select 0, %s10, %s8
  // Predicated region
  $region2: #{hybrid_gcn_sage.4} parent=0 // pred_check
    _
  $region3: #{hybrid_gcn_sage.4} parent=0 // pred_check_branch
    %13 = sbr.rel (0) target = $region5
  $region4: #{hybrid_gcn_sage.4} parent=0 // pred_region
    _
  $region5: #{hybrid_gcn_sage.4} parent=0 // pred_fallthru
    _
  // Predicated region
  $region6: #{hybrid_gcn_sage.4} parent=0 // pred_check
    _
  $region7: #{hybrid_gcn_sage.4} parent=0 // pred_check_branch
    %15 = sbr.rel (0) target = $region9
  $region8: #{hybrid_gcn_sage.4} parent=0 // pred_region
    _
  $region9: #{hybrid_gcn_sage.4} parent=0 // pred_fallthru
    _
  // Predicated region
  $region10: #{hybrid_gcn_sage.4} parent=0 // pred_check
    _
  $region11: #{hybrid_gcn_sage.4} parent=0 // pred_check_branch
    %17 = sbr.rel (0) target = $region13
  $region12: #{hybrid_gcn_sage.4} parent=0 // pred_region
    _
  $region13: #{hybrid_gcn_sage.4} parent=0 // pred_fallthru
    _
  // Predicated region
  $region14: #{hybrid_gcn_sage.4} parent=0 // pred_check
    _
  $region15: #{hybrid_gcn_sage.4} parent=0 // pred_check_branch
    %19 = sbr.rel (0) target = $region17
  $region16: #{hybrid_gcn_sage.4} parent=0 // pred_region
    _
  $region17: #{hybrid_gcn_sage.4} parent=0 // pred_fallthru
    _
  // Predicated region
  $region18: #{hybrid_gcn_sage.4} parent=0 // pred_check
    _
  $region19: #{hybrid_gcn_sage.4} parent=0 // pred_check_branch
    %21 = sbr.rel (0) target = $region21
  $region20: #{hybrid_gcn_sage.4} parent=0 // pred_region
    _
  $region21: #{hybrid_gcn_sage.4} parent=0 // pred_fallthru
    _
  // Predicated region
  $region22: #{hybrid_gcn_sage.4} parent=0 // pred_check
    _
  $region23: #{hybrid_gcn_sage.4} parent=0 // pred_check_branch
    %23 = sbr.rel (0) target = $region25
  $region24: #{hybrid_gcn_sage.4} parent=0 // pred_region
    _
  $region25: #{hybrid_gcn_sage.4} parent=0 // pred_fallthru
    _
  // Predicated region
  $region26: #{hybrid_gcn_sage.4} parent=0 // pred_check
    _
  $region27: #{hybrid_gcn_sage.4} parent=0 // pred_check_branch
    %25 = sbr.rel (0) target = $region29
  $region28: #{hybrid_gcn_sage.4} parent=0 // pred_region
    _
  $region29: #{hybrid_gcn_sage.4} parent=0 // pred_fallthru
    _
  %p27 = scmp.eq.s32.totalorder 0, 0
  // Predicated region
  $region30: #{hybrid_gcn_sage.4} parent=0 // pred_check
    %p28 = pneg %p27
  $region31: #{hybrid_gcn_sage.4} parent=0 // pred_check_branch
    %30 = sbr.rel (%p28) target = $region33
  $region32: #{hybrid_gcn_sage.4} parent=0 // pred_region
    %31 = vst [vmem:[#allocation2] sm:$0xff] 0.0
    %32 = vst [vmem:[#allocation2 + $0x8] sm:$0xff] 0.0
    %33 = vst [vmem:[#allocation2 + $0x10] sm:$0xff] 0.0
    %34 = vst [vmem:[#allocation2 + $0x18] sm:$0xff] 0.0
    %35 = vst [vmem:[#allocation2 + $0x20] sm:$0xff] 0.0
    %36 = vst [vmem:[#allocation2 + $0x28] sm:$0xff] 0.0
    %37 = vst [vmem:[#allocation2 + $0x30] sm:$0xff] 0.0
    %38 = vst [vmem:[#allocation2 + $0x38] sm:$0xff] 0.0
    %39 = vst [vmem:[#allocation2 + $0x40] sm:$0xff] 0.0
    %40 = vst [vmem:[#allocation2 + $0x48] sm:$0xff] 0.0
    %41 = vst [vmem:[#allocation2 + $0x50] sm:$0xff] 0.0
    %42 = vst [vmem:[#allocation2 + $0x58] sm:$0xff] 0.0
    %43 = vst [vmem:[#allocation2 + $0x60] sm:$0xff] 0.0
    %44 = vst [vmem:[#allocation2 + $0x68] sm:$0xff] 0.0
    %45 = vst [vmem:[#allocation2 + $0x70] sm:$0xff] 0.0
    %46 = vst [vmem:[#allocation2 + $0x78] sm:$0xff] 0.0
  $region33: #{hybrid_gcn_sage.4} parent=0 // pred_fallthru
    _
  %s47 = smul.u32 0, 128
  %v48 = vld [vmem:[%s0] sm:$0xff]
  %v49 = vld [vmem:[%s0 + $0x8] sm:$0xff]
  %v50 = vld [vmem:[%s0 + $0x10] sm:$0xff]
  %v51 = vld [vmem:[%s0 + $0x18] sm:$0xff]
  %v52 = vunpack.c.l.s8.bf16 %v48
  %v53 = vunpack.c.h.s8.bf16 %v48
  %v54 = vunpack.c.l.s8.bf16 %v49
  %v55 = vunpack.c.h.s8.bf16 %v49
  %v56 = vunpack.c.l.s8.bf16 %v50
  %v57 = vunpack.c.h.s8.bf16 %v50
  %v58 = vunpack.c.l.s8.bf16 %v51
  %v59 = vunpack.c.h.s8.bf16 %v51
  %v60 = vld [vmem:[#allocation2] sm:$0xff]
  %v61 = vld [vmem:[#allocation2 + $0x8] sm:$0xff]
  %v62 = vld [vmem:[#allocation2 + $0x10] sm:$0xff]
  %v63 = vld [vmem:[#allocation2 + $0x18] sm:$0xff]
  %v64 = vld [vmem:[#allocation2 + $0x20] sm:$0xff]
  %v65 = vld [vmem:[#allocation2 + $0x28] sm:$0xff]
  %v66 = vld [vmem:[#allocation2 + $0x30] sm:$0xff]
  %v67 = vld [vmem:[#allocation2 + $0x38] sm:$0xff]
  %v68 = vld [vmem:[#allocation2 + $0x40] sm:$0xff]
  %v69 = vld [vmem:[#allocation2 + $0x48] sm:$0xff]
  %v70 = vld [vmem:[#allocation2 + $0x50] sm:$0xff]
  %v71 = vld [vmem:[#allocation2 + $0x58] sm:$0xff]
  %v72 = vld [vmem:[#allocation2 + $0x60] sm:$0xff]
  %v73 = vld [vmem:[#allocation2 + $0x68] sm:$0xff]
  %v74 = vld [vmem:[#allocation2 + $0x70] sm:$0xff]
  %v75 = vld [vmem:[#allocation2 + $0x78] sm:$0xff]
  %s76 = sshra.s32 %s47, 3
  %s77 = sand.u32 %s47, 7
  %s78 = smul.addr %s76, 4
  %s79 = scalar_lea.vmem %s1, %s78
  %v80 = vld [vmem:[%s79] sm:$0xf]
  %v81 = vld [vmem:[%s79 + $0x4] sm:$0xf]
  %v82 = vld [vmem:[%s79 + $0x8] sm:$0xf]
  %v83 = vld [vmem:[%s79 + $0xc] sm:$0xf]
  %v84 = vld [vmem:[%s79 + $0x10] sm:$0xf]
  %v85 = vld [vmem:[%s79 + $0x14] sm:$0xf]
  %v86 = vld [vmem:[%s79 + $0x18] sm:$0xf]
  %v87 = vld [vmem:[%s79 + $0x1c] sm:$0xf]
  %v88 = vld [vmem:[%s79 + $0x20] sm:$0xf]
  %v89 = vld [vmem:[%s79 + $0x24] sm:$0xf]
  %v90 = vld [vmem:[%s79 + $0x28] sm:$0xf]
  %v91 = vld [vmem:[%s79 + $0x2c] sm:$0xf]
  %v92 = vld [vmem:[%s79 + $0x30] sm:$0xf]
  %v93 = vld [vmem:[%s79 + $0x34] sm:$0xf]
  %v94 = vld [vmem:[%s79 + $0x38] sm:$0xf]
  %v95 = vld [vmem:[%s79 + $0x3c] sm:$0xf]
  %v112 = vunpack.c.l.b16 %v80
  %v113 = vunpack.c.l.b16 %v81
  %v114 = vunpack.c.l.b16 %v82
  %v115 = vunpack.c.l.b16 %v83
  %v116 = vunpack.c.l.b16 %v84
  %v117 = vunpack.c.l.b16 %v85
  %v118 = vunpack.c.l.b16 %v86
  %v119 = vunpack.c.l.b16 %v87
  %v120 = vunpack.c.l.b16 %v88
  %v121 = vunpack.c.l.b16 %v89
  %v122 = vunpack.c.l.b16 %v90
  %v123 = vunpack.c.l.b16 %v91
  %v124 = vunpack.c.l.b16 %v92
  %v125 = vunpack.c.l.b16 %v93
  %v126 = vunpack.c.l.b16 %v94
  %v127 = vunpack.c.l.b16 %v95
  %v128 = vpack.c.b16 %v113, %v112
  %v129 = vpack.c.b16 %v115, %v114
  %v130 = vpack.c.b16 %v117, %v116
  %v131 = vpack.c.b16 %v119, %v118
  %v132 = vpack.c.b16 %v121, %v120
  %v133 = vpack.c.b16 %v123, %v122
  %v134 = vpack.c.b16 %v125, %v124
  %v135 = vpack.c.b16 %v127, %v126
  %144 = vmatprep.subr.bf16.mxu0 0
  %145 = vmatpush1.bf16.msra.mxu0 %v128
  %146 = vmatprep.subr.bf16.mxu0 0
  %147 = vmatpush1.bf16.msra.mxu0 %v129
  %148 = vmatprep.subr.bf16.mxu0 0
  %149 = vmatpush1.bf16.msra.mxu0 %v130
  %150 = vmatprep.subr.bf16.mxu0 0
  %151 = vmatpush1.bf16.msra.mxu0 %v131
  %152 = vmatprep.subr.bf16.mxu0 0
  %153 = vmatpush1.bf16.msra.mxu0 %v132
  %154 = vmatprep.subr.bf16.mxu0 0
  %155 = vmatpush1.bf16.msra.mxu0 %v133
  %156 = vmatprep.subr.bf16.mxu0 0
  %157 = vmatpush1.bf16.msra.mxu0 %v134
  %158 = vmatprep.subr.bf16.mxu0 0
  %159 = vmatpush1.bf16.msra.mxu0 %v135
  %160 = vmatprep.subr.bf16.mxu0 0
  %161 = vmatpush1.bf16.msra.mxu0 0
  %162 = vmatprep.subr.bf16.mxu0 0
  %163 = vmatpush1.bf16.msra.mxu0 0
  %164 = vmatprep.subr.bf16.mxu0 0
  %165 = vmatpush1.bf16.msra.mxu0 0
  %166 = vmatprep.subr.bf16.mxu0 0
  %167 = vmatpush1.bf16.msra.mxu0 0
  %168 = vmatprep.subr.bf16.mxu0 0
  %169 = vmatpush1.bf16.msra.mxu0 0
  %170 = vmatprep.subr.bf16.mxu0 0
  %171 = vmatpush1.bf16.msra.mxu0 0
  %172 = vmatprep.subr.bf16.mxu0 0
  %173 = vmatpush1.bf16.msra.mxu0 0
  %174 = vmatprep.subr.bf16.mxu0 0
  %175 = vmatpush1.bf16.msra.mxu0 0
  %176 = vmatprep.mubr.bf16.mxu0 0
  %177 = vmatmul.mubr.bf16.gmra.mrb[0].mxu0 %v52
  %v178 = vpop.f32.mrb[0].mxu0
  %v179 = vadd.f32 0.0, %v178
  %v180 = vpop.f32.mrb[0].mxu0
  %v181 = vpop.f32.mrb[0].mxu0
  %v182 = vadd.f32 0.0, %v181
  %v183 = vpop.f32.mrb[0].mxu0
  %184 = vmatprep.mubr.bf16.mxu0 0
  %185 = vmatmul.mubr.bf16.gmra.mrb[0].mxu0 %v53
  %v186 = vpop.f32.mrb[0].mxu0
  %v187 = vadd.f32 0.0, %v186
  %v188 = vpop.f32.mrb[0].mxu0
  %v189 = vpop.f32.mrb[0].mxu0
  %v190 = vadd.f32 0.0, %v189
  %v191 = vpop.f32.mrb[0].mxu0
  %192 = vmatprep.mubr.bf16.mxu0 0
  %193 = vmatmul.mubr.bf16.gmra.mrb[0].mxu0 %v54
  %v194 = vpop.f32.mrb[0].mxu0
  %v195 = vadd.f32 0.0, %v194
  %v196 = vpop.f32.mrb[0].mxu0
  %v197 = vpop.f32.mrb[0].mxu0
  %v198 = vadd.f32 0.0, %v197
  %v199 = vpop.f32.mrb[0].mxu0
  %200 = vmatprep.mubr.bf16.mxu0 0
  %201 = vmatmul.mubr.bf16.gmra.mrb[0].mxu0 %v55
  %v202 = vpop.f32.mrb[0].mxu0
  %v203 = vadd.f32 0.0, %v202
  %v204 = vpop.f32.mrb[0].mxu0
  %v205 = vpop.f32.mrb[0].mxu0
  %v206 = vadd.f32 0.0, %v205
  %v207 = vpop.f32.mrb[0].mxu0
  %208 = vmatprep.mubr.bf16.mxu0 0
  %209 = vmatmul.mubr.bf16.gmra.mrb[0].mxu0 %v56
  %v210 = vpop.f32.mrb[0].mxu0
  %v211 = vadd.f32 0.0, %v210
  %v212 = vpop.f32.mrb[0].mxu0
  %v213 = vpop.f32.mrb[0].mxu0
  %v214 = vadd.f32 0.0, %v213
  %v215 = vpop.f32.mrb[0].mxu0
  %216 = vmatprep.mubr.bf16.mxu0 0
  %217 = vmatmul.mubr.bf16.gmra.mrb[0].mxu0 %v57
  %v218 = vpop.f32.mrb[0].mxu0
  %v219 = vadd.f32 0.0, %v218
  %v220 = vpop.f32.mrb[0].mxu0
  %v221 = vpop.f32.mrb[0].mxu0
  %v222 = vadd.f32 0.0, %v221
  %v223 = vpop.f32.mrb[0].mxu0
  %224 = vmatprep.mubr.bf16.mxu0 0
  %225 = vmatmul.mubr.bf16.gmra.mrb[0].mxu0 %v58
  %v226 = vpop.f32.mrb[0].mxu0
  %v227 = vadd.f32 0.0, %v226
  %v228 = vpop.f32.mrb[0].mxu0
  %v229 = vpop.f32.mrb[0].mxu0
  %v230 = vadd.f32 0.0, %v229
  %v231 = vpop.f32.mrb[0].mxu0
  %232 = vmatprep.mubr.bf16.mxu0 0
  %233 = vmatmul.mubr.bf16.gmra.mrb[0].mxu0 %v59
  %v234 = vpop.f32.mrb[0].mxu0
  %v235 = vadd.f32 0.0, %v234
  %v236 = vpop.f32.mrb[0].mxu0
  %v237 = vpop.f32.mrb[0].mxu0
  %v238 = vadd.f32 0.0, %v237
  %v239 = vpop.f32.mrb[0].mxu0
  %240 = vdwg.mxu0
  %v241 = vadd.f32 %v60, %v179
  %v242 = vadd.f32 %v61, %v182
  %v243 = vadd.f32 %v62, %v187
  %v244 = vadd.f32 %v63, %v190
  %v245 = vadd.f32 %v64, %v195
  %v246 = vadd.f32 %v65, %v198
  %v247 = vadd.f32 %v66, %v203
  %v248 = vadd.f32 %v67, %v206
  %v249 = vadd.f32 %v68, %v211
  %v250 = vadd.f32 %v69, %v214
  %v251 = vadd.f32 %v70, %v219
  %v252 = vadd.f32 %v71, %v222
  %v253 = vadd.f32 %v72, %v227
  %v254 = vadd.f32 %v73, %v230
  %v255 = vadd.f32 %v74, %v235
  %v256 = vadd.f32 %v75, %v238
  %257 = vst [vmem:[#allocation2] sm:$0xff] %v241
  %258 = vst [vmem:[#allocation2 + $0x8] sm:$0xff] %v242
  %259 = vst [vmem:[#allocation2 + $0x10] sm:$0xff] %v243
  %260 = vst [vmem:[#allocation2 + $0x18] sm:$0xff] %v244
  %261 = vst [vmem:[#allocation2 + $0x20] sm:$0xff] %v245
  %262 = vst [vmem:[#allocation2 + $0x28] sm:$0xff] %v246
  %263 = vst [vmem:[#allocation2 + $0x30] sm:$0xff] %v247
  %264 = vst [vmem:[#allocation2 + $0x38] sm:$0xff] %v248
  %265 = vst [vmem:[#allocation2 + $0x40] sm:$0xff] %v249
  %266 = vst [vmem:[#allocation2 + $0x48] sm:$0xff] %v250
  %267 = vst [vmem:[#allocation2 + $0x50] sm:$0xff] %v251
  %268 = vst [vmem:[#allocation2 + $0x58] sm:$0xff] %v252
  %269 = vst [vmem:[#allocation2 + $0x60] sm:$0xff] %v253
  %270 = vst [vmem:[#allocation2 + $0x68] sm:$0xff] %v254
  %271 = vst [vmem:[#allocation2 + $0x70] sm:$0xff] %v255
  %272 = vst [vmem:[#allocation2 + $0x78] sm:$0xff] %v256
  // Predicated region
  $region34: #{hybrid_gcn_sage.4} parent=0 // pred_check
    %p273 = pneg %p27
  $region35: #{hybrid_gcn_sage.4} parent=0 // pred_check_branch
    %275 = sbr.rel (%p273) target = $region37
  $region36: #{hybrid_gcn_sage.4} parent=0 // pred_region
    %s276 = smul.u32 0, 128
    %v277 = vld [vmem:[%s2] sm:$0xff]
    %v278 = vld [vmem:[%s2 + $0x8] sm:$0xff]
    %v279 = vld [vmem:[%s2 + $0x10] sm:$0xff]
    %v280 = vld [vmem:[%s2 + $0x18] sm:$0xff]
    %v281 = vld [vmem:[%s2 + $0x20] sm:$0xff]
    %v282 = vld [vmem:[%s2 + $0x28] sm:$0xff]
    %v283 = vld [vmem:[%s2 + $0x30] sm:$0xff]
    %v284 = vld [vmem:[%s2 + $0x38] sm:$0xff]
    %v285 = vld [vmem:[%s2 + $0x40] sm:$0xff]
    %v286 = vld [vmem:[%s2 + $0x48] sm:$0xff]
    %v287 = vld [vmem:[%s2 + $0x50] sm:$0xff]
    %v288 = vld [vmem:[%s2 + $0x58] sm:$0xff]
    %v289 = vld [vmem:[%s2 + $0x60] sm:$0xff]
    %v290 = vld [vmem:[%s2 + $0x68] sm:$0xff]
    %v291 = vld [vmem:[%s2 + $0x70] sm:$0xff]
    %v292 = vld [vmem:[%s2 + $0x78] sm:$0xff]
    %v293 = vld [vmem:[#allocation2] sm:$0xff]
    %v294 = vld [vmem:[#allocation2 + $0x8] sm:$0xff]
    %v295 = vld [vmem:[#allocation2 + $0x10] sm:$0xff]
    %v296 = vld [vmem:[#allocation2 + $0x18] sm:$0xff]
    %v297 = vld [vmem:[#allocation2 + $0x20] sm:$0xff]
    %v298 = vld [vmem:[#allocation2 + $0x28] sm:$0xff]
    %v299 = vld [vmem:[#allocation2 + $0x30] sm:$0xff]
    %v300 = vld [vmem:[#allocation2 + $0x38] sm:$0xff]
    %v301 = vld [vmem:[#allocation2 + $0x40] sm:$0xff]
    %v302 = vld [vmem:[#allocation2 + $0x48] sm:$0xff]
    %v303 = vld [vmem:[#allocation2 + $0x50] sm:$0xff]
    %v304 = vld [vmem:[#allocation2 + $0x58] sm:$0xff]
    %v305 = vld [vmem:[#allocation2 + $0x60] sm:$0xff]
    %v306 = vld [vmem:[#allocation2 + $0x68] sm:$0xff]
    %v307 = vld [vmem:[#allocation2 + $0x70] sm:$0xff]
    %v308 = vld [vmem:[#allocation2 + $0x78] sm:$0xff]
    %310 = vset.pattern.permute.xlu0 0
    %311 = vperm.xlu0 %310, %v277
    %v312 = vpop.permute.xlu0 %311
    %315 = vset.pattern.permute.xlu0 0
    %316 = vperm.xlu0 %315, %v278
    %v317 = vpop.permute.xlu0 %316
    %320 = vset.pattern.permute.xlu0 0
    %321 = vperm.xlu0 %320, %v279
    %v322 = vpop.permute.xlu0 %321
    %325 = vset.pattern.permute.xlu0 0
    %326 = vperm.xlu0 %325, %v280
    %v327 = vpop.permute.xlu0 %326
    %330 = vset.pattern.permute.xlu0 0
    %331 = vperm.xlu0 %330, %v281
    %v332 = vpop.permute.xlu0 %331
    %335 = vset.pattern.permute.xlu0 0
    %336 = vperm.xlu0 %335, %v282
    %v337 = vpop.permute.xlu0 %336
    %340 = vset.pattern.permute.xlu0 0
    %341 = vperm.xlu0 %340, %v283
    %v342 = vpop.permute.xlu0 %341
    %345 = vset.pattern.permute.xlu0 0
    %346 = vperm.xlu0 %345, %v284
    %v347 = vpop.permute.xlu0 %346
    %350 = vset.pattern.permute.xlu0 0
    %351 = vperm.xlu0 %350, %v285
    %v352 = vpop.permute.xlu0 %351
    %355 = vset.pattern.permute.xlu0 0
    %356 = vperm.xlu0 %355, %v286
    %v357 = vpop.permute.xlu0 %356
    %360 = vset.pattern.permute.xlu0 0
    %361 = vperm.xlu0 %360, %v287
    %v362 = vpop.permute.xlu0 %361
    %365 = vset.pattern.permute.xlu0 0
    %366 = vperm.xlu0 %365, %v288
    %v367 = vpop.permute.xlu0 %366
    %370 = vset.pattern.permute.xlu0 0
    %371 = vperm.xlu0 %370, %v289
    %v372 = vpop.permute.xlu0 %371
    %375 = vset.pattern.permute.xlu0 0
    %376 = vperm.xlu0 %375, %v290
    %v377 = vpop.permute.xlu0 %376
    %380 = vset.pattern.permute.xlu0 0
    %381 = vperm.xlu0 %380, %v291
    %v382 = vpop.permute.xlu0 %381
    %385 = vset.pattern.permute.xlu0 0
    %386 = vperm.xlu0 %385, %v292
    %v387 = vpop.permute.xlu0 %386
    %v389 = vmul.f32 %v312, %v293
    %v390 = vmul.f32 %v317, %v294
    %v391 = vmul.f32 %v322, %v295
    %v392 = vmul.f32 %v327, %v296
    %v393 = vmul.f32 %v332, %v297
    %v394 = vmul.f32 %v337, %v298
    %v395 = vmul.f32 %v342, %v299
    %v396 = vmul.f32 %v347, %v300
    %v397 = vmul.f32 %v352, %v301
    %v398 = vmul.f32 %v357, %v302
    %v399 = vmul.f32 %v362, %v303
    %v400 = vmul.f32 %v367, %v304
    %v401 = vmul.f32 %v372, %v305
    %v402 = vmul.f32 %v377, %v306
    %v403 = vmul.f32 %v382, %v307
    %v404 = vmul.f32 %v387, %v308
    %s405 = sshra.s32 %s276, 3
    %s406 = sand.u32 %s276, 7
    %s407 = smul.addr %s405, 4
    %s408 = scalar_lea.vmem %s1, %s407
    %v409 = vld [vmem:[%s408] sm:$0xf]
    %v410 = vld [vmem:[%s408 + $0x4] sm:$0xf]
    %v411 = vld [vmem:[%s408 + $0x8] sm:$0xf]
    %v412 = vld [vmem:[%s408 + $0xc] sm:$0xf]
    %v413 = vld [vmem:[%s408 + $0x10] sm:$0xf]
    %v414 = vld [vmem:[%s408 + $0x14] sm:$0xf]
    %v415 = vld [vmem:[%s408 + $0x18] sm:$0xf]
    %v416 = vld [vmem:[%s408 + $0x1c] sm:$0xf]
    %v417 = vld [vmem:[%s408 + $0x20] sm:$0xf]
    %v418 = vld [vmem:[%s408 + $0x24] sm:$0xf]
    %v419 = vld [vmem:[%s408 + $0x28] sm:$0xf]
    %v420 = vld [vmem:[%s408 + $0x2c] sm:$0xf]
    %v421 = vld [vmem:[%s408 + $0x30] sm:$0xf]
    %v422 = vld [vmem:[%s408 + $0x34] sm:$0xf]
    %v423 = vld [vmem:[%s408 + $0x38] sm:$0xf]
    %v424 = vld [vmem:[%s408 + $0x3c] sm:$0xf]
    %v425 = vunpack.c.l.bf16 %v409
    %v426 = vunpack.c.l.bf16 %v410
    %v427 = vunpack.c.l.bf16 %v411
    %v428 = vunpack.c.l.bf16 %v412
    %v429 = vunpack.c.l.bf16 %v413
    %v430 = vunpack.c.l.bf16 %v414
    %v431 = vunpack.c.l.bf16 %v415
    %v432 = vunpack.c.l.bf16 %v416
    %v433 = vunpack.c.l.bf16 %v417
    %v434 = vunpack.c.l.bf16 %v418
    %v435 = vunpack.c.l.bf16 %v419
    %v436 = vunpack.c.l.bf16 %v420
    %v437 = vunpack.c.l.bf16 %v421
    %v438 = vunpack.c.l.bf16 %v422
    %v439 = vunpack.c.l.bf16 %v423
    %v440 = vunpack.c.l.bf16 %v424
    %v441 = vld [vmem:[%s4] sm:$0xff]
    %v442 = vld [vmem:[%s4 + $0x8] sm:$0xff]
    %v443 = vld [vmem:[%s4 + $0x10] sm:$0xff]
    %v444 = vld [vmem:[%s4 + $0x18] sm:$0xff]
    %v445 = vld [vmem:[%s4 + $0x20] sm:$0xff]
    %v446 = vld [vmem:[%s4 + $0x28] sm:$0xff]
    %v447 = vld [vmem:[%s4 + $0x30] sm:$0xff]
    %v448 = vld [vmem:[%s4 + $0x38] sm:$0xff]
    %v449 = vld [vmem:[%s4 + $0x40] sm:$0xff]
    %v450 = vld [vmem:[%s4 + $0x48] sm:$0xff]
    %v451 = vld [vmem:[%s4 + $0x50] sm:$0xff]
    %v452 = vld [vmem:[%s4 + $0x58] sm:$0xff]
    %v453 = vld [vmem:[%s4 + $0x60] sm:$0xff]
    %v454 = vld [vmem:[%s4 + $0x68] sm:$0xff]
    %v455 = vld [vmem:[%s4 + $0x70] sm:$0xff]
    %v456 = vld [vmem:[%s4 + $0x78] sm:$0xff]
    %v457 = vld [vmem:[%s5] sm:$0x1]
    %v459 = vlaneseq
    %v460 = vshrl.u32 %v459, 7
    %v461 = vsub.s32 0, %v460
    %v462 = vrot.slane %v457, %v461
    %464 = vmatprep.subr.mxu0 0.0
    %465 = vmatpush1.msra.mxu0 %v441
    %466 = vmatprep.subr.mxu0 0.0
    %467 = vmatpush1.msra.mxu0 %v442
    %468 = vmatprep.subr.mxu0 0.0
    %469 = vmatpush1.msra.mxu0 %v443
    %470 = vmatprep.subr.mxu0 0.0
    %471 = vmatpush1.msra.mxu0 %v444
    %472 = vmatprep.subr.mxu0 0.0
    %473 = vmatpush1.msra.mxu0 %v445
    %474 = vmatprep.subr.mxu0 0.0
    %475 = vmatpush1.msra.mxu0 %v446
    %476 = vmatprep.subr.mxu0 0.0
    %477 = vmatpush1.msra.mxu0 %v447
    %478 = vmatprep.subr.mxu0 0.0
    %479 = vmatpush1.msra.mxu0 %v448
    %480 = vmatprep.subr.mxu0 0.0
    %481 = vmatpush1.msra.mxu0 %v449
    %482 = vmatprep.subr.mxu0 0.0
    %483 = vmatpush1.msra.mxu0 %v450
    %484 = vmatprep.subr.mxu0 0.0
    %485 = vmatpush1.msra.mxu0 %v451
    %486 = vmatprep.subr.mxu0 0.0
    %487 = vmatpush1.msra.mxu0 %v452
    %488 = vmatprep.subr.mxu0 0.0
    %489 = vmatpush1.msra.mxu0 %v453
    %490 = vmatprep.subr.mxu0 0.0
    %491 = vmatpush1.msra.mxu0 %v454
    %492 = vmatprep.subr.mxu0 0.0
    %493 = vmatpush1.msra.mxu0 %v455
    %494 = vmatprep.subr.mxu0 0.0
    %495 = vmatpush1.msra.mxu0 %v456
    %496 = vmatprep.subr.mxu0 0.0
    %497 = vmatpush1.msra.mxu0 0.0
    %498 = vmatprep.subr.mxu0 0.0
    %499 = vmatpush1.msra.mxu0 0.0
    %500 = vmatprep.subr.mxu0 0.0
    %501 = vmatpush1.msra.mxu0 0.0
    %502 = vmatprep.subr.mxu0 0.0
    %503 = vmatpush1.msra.mxu0 0.0
    %504 = vmatprep.subr.mxu0 0.0
    %505 = vmatpush1.msra.mxu0 0.0
    %506 = vmatprep.subr.mxu0 0.0
    %507 = vmatpush1.msra.mxu0 0.0
    %508 = vmatprep.subr.mxu0 0.0
    %509 = vmatpush1.msra.mxu0 0.0
    %510 = vmatprep.subr.mxu0 0.0
    %511 = vmatpush1.msra.mxu0 0.0
    %512 = vmatprep.subr.mxu0 0.0
    %513 = vmatpush1.msra.mxu0 0.0
    %514 = vmatprep.subr.mxu0 0.0
    %515 = vmatpush1.msra.mxu0 0.0
    %516 = vmatprep.subr.mxu0 0.0
    %517 = vmatpush1.msra.mxu0 0.0
    %518 = vmatprep.subr.mxu0 0.0
    %519 = vmatpush1.msra.mxu0 0.0
    %520 = vmatprep.subr.mxu0 0.0
    %521 = vmatpush1.msra.mxu0 0.0
    %522 = vmatprep.subr.mxu0 0.0
    %523 = vmatpush1.msra.mxu0 0.0
    %524 = vmatprep.subr.mxu0 0.0
    %525 = vmatpush1.msra.mxu0 0.0
    %526 = vmatprep.subr.mxu0 0.0
    %527 = vmatpush1.msra.mxu0 0.0
    %528 = vmatprep.mubr.f32.mxu0 0.0
    %529 = vmatmul.mubr.f32.gmra.mrb[0].mxu0 %v389
    %v530 = vpop.f32.mrb[0].mxu0
    %v531 = vadd.f32 %v462, %v530
    %v532 = vpop.f32.mrb[0].mxu0
    %533 = vmatprep.mubr.f32.mxu0 0.0
    %534 = vmatmul.mubr.f32.gmra.mrb[0].mxu0 %v390
    %v535 = vpop.f32.mrb[0].mxu0
    %v536 = vadd.f32 %v462, %v535
    %v537 = vpop.f32.mrb[0].mxu0
    %538 = vmatprep.mubr.f32.mxu0 0.0
    %539 = vmatmul.mubr.f32.gmra.mrb[0].mxu0 %v391
    %v540 = vpop.f32.mrb[0].mxu0
    %v541 = vadd.f32 %v462, %v540
    %v542 = vpop.f32.mrb[0].mxu0
    %543 = vmatprep.mubr.f32.mxu0 0.0
    %544 = vmatmul.mubr.f32.gmra.mrb[0].mxu0 %v392
    %v545 = vpop.f32.mrb[0].mxu0
    %v546 = vadd.f32 %v462, %v545
    %v547 = vpop.f32.mrb[0].mxu0
    %548 = vmatprep.mubr.f32.mxu0 0.0
    %549 = vmatmul.mubr.f32.gmra.mrb[0].mxu0 %v393
    %v550 = vpop.f32.mrb[0].mxu0
    %v551 = vadd.f32 %v462, %v550
    %v552 = vpop.f32.mrb[0].mxu0
    %553 = vmatprep.mubr.f32.mxu0 0.0
    %554 = vmatmul.mubr.f32.gmra.mrb[0].mxu0 %v394
    %v555 = vpop.f32.mrb[0].mxu0
    %v556 = vadd.f32 %v462, %v555
    %v557 = vpop.f32.mrb[0].mxu0
    %558 = vmatprep.mubr.f32.mxu0 0.0
    %559 = vmatmul.mubr.f32.gmra.mrb[0].mxu0 %v395
    %v560 = vpop.f32.mrb[0].mxu0
    %v561 = vadd.f32 %v462, %v560
    %v562 = vpop.f32.mrb[0].mxu0
    %563 = vmatprep.mubr.f32.mxu0 0.0
    %564 = vmatmul.mubr.f32.gmra.mrb[0].mxu0 %v396
    %v565 = vpop.f32.mrb[0].mxu0
    %v566 = vadd.f32 %v462, %v565
    %v567 = vpop.f32.mrb[0].mxu0
    %568 = vmatprep.mubr.f32.mxu0 0.0
    %569 = vmatmul.mubr.f32.gmra.mrb[0].mxu0 %v397
    %v570 = vpop.f32.mrb[0].mxu0
    %v571 = vadd.f32 %v462, %v570
    %v572 = vpop.f32.mrb[0].mxu0
    %573 = vmatprep.mubr.f32.mxu0 0.0
    %574 = vmatmul.mubr.f32.gmra.mrb[0].mxu0 %v398
    %v575 = vpop.f32.mrb[0].mxu0
    %v576 = vadd.f32 %v462, %v575
    %v577 = vpop.f32.mrb[0].mxu0
    %578 = vmatprep.mubr.f32.mxu0 0.0
    %579 = vmatmul.mubr.f32.gmra.mrb[0].mxu0 %v399
    %v580 = vpop.f32.mrb[0].mxu0
    %v581 = vadd.f32 %v462, %v580
    %v582 = vpop.f32.mrb[0].mxu0
    %583 = vmatprep.mubr.f32.mxu0 0.0
    %584 = vmatmul.mubr.f32.gmra.mrb[0].mxu0 %v400
    %v585 = vpop.f32.mrb[0].mxu0
    %v586 = vadd.f32 %v462, %v585
    %v587 = vpop.f32.mrb[0].mxu0
    %588 = vmatprep.mubr.f32.mxu0 0.0
    %589 = vmatmul.mubr.f32.gmra.mrb[0].mxu0 %v401
    %v590 = vpop.f32.mrb[0].mxu0
    %v591 = vadd.f32 %v462, %v590
    %v592 = vpop.f32.mrb[0].mxu0
    %593 = vmatprep.mubr.f32.mxu0 0.0
    %594 = vmatmul.mubr.f32.gmra.mrb[0].mxu0 %v402
    %v595 = vpop.f32.mrb[0].mxu0
    %v596 = vadd.f32 %v462, %v595
    %v597 = vpop.f32.mrb[0].mxu0
    %598 = vmatprep.mubr.f32.mxu0 0.0
    %599 = vmatmul.mubr.f32.gmra.mrb[0].mxu0 %v403
    %v600 = vpop.f32.mrb[0].mxu0
    %v601 = vadd.f32 %v462, %v600
    %v602 = vpop.f32.mrb[0].mxu0
    %603 = vmatprep.mubr.f32.mxu0 0.0
    %604 = vmatmul.mubr.f32.gmra.mrb[0].mxu0 %v404
    %v605 = vpop.f32.mrb[0].mxu0
    %v606 = vadd.f32 %v462, %v605
    %v607 = vpop.f32.mrb[0].mxu0
    %608 = vdwg.mxu0
    %v609 = vld [vmem:[%s6] sm:$0xff]
    %v610 = vld [vmem:[%s6 + $0x8] sm:$0xff]
    %v611 = vld [vmem:[%s6 + $0x10] sm:$0xff]
    %v612 = vld [vmem:[%s6 + $0x18] sm:$0xff]
    %v613 = vld [vmem:[%s6 + $0x20] sm:$0xff]
    %v614 = vld [vmem:[%s6 + $0x28] sm:$0xff]
    %v615 = vld [vmem:[%s6 + $0x30] sm:$0xff]
    %v616 = vld [vmem:[%s6 + $0x38] sm:$0xff]
    %v617 = vld [vmem:[%s6 + $0x40] sm:$0xff]
    %v618 = vld [vmem:[%s6 + $0x48] sm:$0xff]
    %v619 = vld [vmem:[%s6 + $0x50] sm:$0xff]
    %v620 = vld [vmem:[%s6 + $0x58] sm:$0xff]
    %v621 = vld [vmem:[%s6 + $0x60] sm:$0xff]
    %v622 = vld [vmem:[%s6 + $0x68] sm:$0xff]
    %v623 = vld [vmem:[%s6 + $0x70] sm:$0xff]
    %v624 = vld [vmem:[%s6 + $0x78] sm:$0xff]
    %625 = vmatprep.subr.mxu0 0.0
    %626 = vmatpush1.msra.mxu0 %v609
    %627 = vmatprep.subr.mxu0 0.0
    %628 = vmatpush1.msra.mxu0 %v610
    %629 = vmatprep.subr.mxu0 0.0
    %630 = vmatpush1.msra.mxu0 %v611
    %631 = vmatprep.subr.mxu0 0.0
    %632 = vmatpush1.msra.mxu0 %v612
    %633 = vmatprep.subr.mxu0 0.0
    %634 = vmatpush1.msra.mxu0 %v613
    %635 = vmatprep.subr.mxu0 0.0
    %636 = vmatpush1.msra.mxu0 %v614
    %637 = vmatprep.subr.mxu0 0.0
    %638 = vmatpush1.msra.mxu0 %v615
    %639 = vmatprep.subr.mxu0 0.0
    %640 = vmatpush1.msra.mxu0 %v616
    %641 = vmatprep.subr.mxu0 0.0
    %642 = vmatpush1.msra.mxu0 %v617
    %643 = vmatprep.subr.mxu0 0.0
    %644 = vmatpush1.msra.mxu0 %v618
    %645 = vmatprep.subr.mxu0 0.0
    %646 = vmatpush1.msra.mxu0 %v619
    %647 = vmatprep.subr.mxu0 0.0
    %648 = vmatpush1.msra.mxu0 %v620
    %649 = vmatprep.subr.mxu0 0.0
    %650 = vmatpush1.msra.mxu0 %v621
    %651 = vmatprep.subr.mxu0 0.0
    %652 = vmatpush1.msra.mxu0 %v622
    %653 = vmatprep.subr.mxu0 0.0
    %654 = vmatpush1.msra.mxu0 %v623
    %655 = vmatprep.subr.mxu0 0.0
    %656 = vmatpush1.msra.mxu0 %v624
    %657 = vmatprep.subr.mxu0 0.0
    %658 = vmatpush1.msra.mxu0 0.0
    %659 = vmatprep.subr.mxu0 0.0
    %660 = vmatpush1.msra.mxu0 0.0
    %661 = vmatprep.subr.mxu0 0.0
    %662 = vmatpush1.msra.mxu0 0.0
    %663 = vmatprep.subr.mxu0 0.0
    %664 = vmatpush1.msra.mxu0 0.0
    %665 = vmatprep.subr.mxu0 0.0
    %666 = vmatpush1.msra.mxu0 0.0
    %667 = vmatprep.subr.mxu0 0.0
    %668 = vmatpush1.msra.mxu0 0.0
    %669 = vmatprep.subr.mxu0 0.0
    %670 = vmatpush1.msra.mxu0 0.0
    %671 = vmatprep.subr.mxu0 0.0
    %672 = vmatpush1.msra.mxu0 0.0
    %673 = vmatprep.subr.mxu0 0.0
    %674 = vmatpush1.msra.mxu0 0.0
    %675 = vmatprep.subr.mxu0 0.0
    %676 = vmatpush1.msra.mxu0 0.0
    %677 = vmatprep.subr.mxu0 0.0
    %678 = vmatpush1.msra.mxu0 0.0
    %679 = vmatprep.subr.mxu0 0.0
    %680 = vmatpush1.msra.mxu0 0.0
    %681 = vmatprep.subr.mxu0 0.0
    %682 = vmatpush1.msra.mxu0 0.0
    %683 = vmatprep.subr.mxu0 0.0
    %684 = vmatpush1.msra.mxu0 0.0
    %685 = vmatprep.subr.mxu0 0.0
    %686 = vmatpush1.msra.mxu0 0.0
    %687 = vmatprep.subr.mxu0 0.0
    %688 = vmatpush1.msra.mxu0 0.0
    %689 = vmatprep.mubr.f32.mxu0 0.0
    %690 = vmatmul.mubr.f32.gmra.mrb[0].mxu0 %v425
    %v691 = vpop.f32.mrb[0].mxu0
    %v692 = vadd.f32 0.0, %v691
    %v693 = vpop.f32.mrb[0].mxu0
    %694 = vmatprep.mubr.f32.mxu0 0.0
    %695 = vmatmul.mubr.f32.gmra.mrb[0].mxu0 %v426
    %v696 = vpop.f32.mrb[0].mxu0
    %v697 = vadd.f32 0.0, %v696
    %v698 = vpop.f32.mrb[0].mxu0
    %699 = vmatprep.mubr.f32.mxu0 0.0
    %700 = vmatmul.mubr.f32.gmra.mrb[0].mxu0 %v427
    %v701 = vpop.f32.mrb[0].mxu0
    %v702 = vadd.f32 0.0, %v701
    %v703 = vpop.f32.mrb[0].mxu0
    %704 = vmatprep.mubr.f32.mxu0 0.0
    %705 = vmatmul.mubr.f32.gmra.mrb[0].mxu0 %v428
    %v706 = vpop.f32.mrb[0].mxu0
    %v707 = vadd.f32 0.0, %v706
    %v708 = vpop.f32.mrb[0].mxu0
    %709 = vmatprep.mubr.f32.mxu0 0.0
    %710 = vmatmul.mubr.f32.gmra.mrb[0].mxu0 %v429
    %v711 = vpop.f32.mrb[0].mxu0
    %v712 = vadd.f32 0.0, %v711
    %v713 = vpop.f32.mrb[0].mxu0
    %714 = vmatprep.mubr.f32.mxu0 0.0
    %715 = vmatmul.mubr.f32.gmra.mrb[0].mxu0 %v430
    %v716 = vpop.f32.mrb[0].mxu0
    %v717 = vadd.f32 0.0, %v716
    %v718 = vpop.f32.mrb[0].mxu0
    %719 = vmatprep.mubr.f32.mxu0 0.0
    %720 = vmatmul.mubr.f32.gmra.mrb[0].mxu0 %v431
    %v721 = vpop.f32.mrb[0].mxu0
    %v722 = vadd.f32 0.0, %v721
    %v723 = vpop.f32.mrb[0].mxu0
    %724 = vmatprep.mubr.f32.mxu0 0.0
    %725 = vmatmul.mubr.f32.gmra.mrb[0].mxu0 %v432
    %v726 = vpop.f32.mrb[0].mxu0
    %v727 = vadd.f32 0.0, %v726
    %v728 = vpop.f32.mrb[0].mxu0
    %729 = vmatprep.mubr.f32.mxu0 0.0
    %730 = vmatmul.mubr.f32.gmra.mrb[0].mxu0 %v433
    %v731 = vpop.f32.mrb[0].mxu0
    %v732 = vadd.f32 0.0, %v731
    %v733 = vpop.f32.mrb[0].mxu0
    %734 = vmatprep.mubr.f32.mxu0 0.0
    %735 = vmatmul.mubr.f32.gmra.mrb[0].mxu0 %v434
    %v736 = vpop.f32.mrb[0].mxu0
    %v737 = vadd.f32 0.0, %v736
    %v738 = vpop.f32.mrb[0].mxu0
    %739 = vmatprep.mubr.f32.mxu0 0.0
    %740 = vmatmul.mubr.f32.gmra.mrb[0].mxu0 %v435
    %v741 = vpop.f32.mrb[0].mxu0
    %v742 = vadd.f32 0.0, %v741
    %v743 = vpop.f32.mrb[0].mxu0
    %744 = vmatprep.mubr.f32.mxu0 0.0
    %745 = vmatmul.mubr.f32.gmra.mrb[0].mxu0 %v436
    %v746 = vpop.f32.mrb[0].mxu0
    %v747 = vadd.f32 0.0, %v746
    %v748 = vpop.f32.mrb[0].mxu0
    %749 = vmatprep.mubr.f32.mxu0 0.0
    %750 = vmatmul.mubr.f32.gmra.mrb[0].mxu0 %v437
    %v751 = vpop.f32.mrb[0].mxu0
    %v752 = vadd.f32 0.0, %v751
    %v753 = vpop.f32.mrb[0].mxu0
    %754 = vmatprep.mubr.f32.mxu0 0.0
    %755 = vmatmul.mubr.f32.gmra.mrb[0].mxu0 %v438
    %v756 = vpop.f32.mrb[0].mxu0
    %v757 = vadd.f32 0.0, %v756
    %v758 = vpop.f32.mrb[0].mxu0
    %759 = vmatprep.mubr.f32.mxu0 0.0
    %760 = vmatmul.mubr.f32.gmra.mrb[0].mxu0 %v439
    %v761 = vpop.f32.mrb[0].mxu0
    %v762 = vadd.f32 0.0, %v761
    %v763 = vpop.f32.mrb[0].mxu0
    %764 = vmatprep.mubr.f32.mxu0 0.0
    %765 = vmatmul.mubr.f32.gmra.mrb[0].mxu0 %v440
    %v766 = vpop.f32.mrb[0].mxu0
    %v767 = vadd.f32 0.0, %v766
    %v768 = vpop.f32.mrb[0].mxu0
    %769 = vdwg.mxu0
    %v770 = vadd.f32 %v531, %v692
    %v771 = vadd.f32 %v536, %v697
    %v772 = vadd.f32 %v541, %v702
    %v773 = vadd.f32 %v546, %v707
    %v774 = vadd.f32 %v551, %v712
    %v775 = vadd.f32 %v556, %v717
    %v776 = vadd.f32 %v561, %v722
    %v777 = vadd.f32 %v566, %v727
    %v778 = vadd.f32 %v571, %v732
    %v779 = vadd.f32 %v576, %v737
    %v780 = vadd.f32 %v581, %v742
    %v781 = vadd.f32 %v586, %v747
    %v782 = vadd.f32 %v591, %v752
    %v783 = vadd.f32 %v596, %v757
    %v784 = vadd.f32 %v601, %v762
    %v785 = vadd.f32 %v606, %v767
    %v786 = vmax.f32 %v770, 0.0
    %v787 = vmax.f32 %v771, 0.0
    %v788 = vmax.f32 %v772, 0.0
    %v789 = vmax.f32 %v773, 0.0
    %v790 = vmax.f32 %v774, 0.0
    %v791 = vmax.f32 %v775, 0.0
    %v792 = vmax.f32 %v776, 0.0
    %v793 = vmax.f32 %v777, 0.0
    %v794 = vmax.f32 %v778, 0.0
    %v795 = vmax.f32 %v779, 0.0
    %v796 = vmax.f32 %v780, 0.0
    %v797 = vmax.f32 %v781, 0.0
    %v798 = vmax.f32 %v782, 0.0
    %v799 = vmax.f32 %v783, 0.0
    %v800 = vmax.f32 %v784, 0.0
    %v801 = vmax.f32 %v785, 0.0
    %v802 = vld [vmem:[%s3] sm:$0xff]
    %v803 = vld [vmem:[%s3 + $0x8] sm:$0xff]
    %v804 = vld [vmem:[%s3 + $0x10] sm:$0xff]
    %v805 = vld [vmem:[%s3 + $0x18] sm:$0xff]
    %v806 = vld [vmem:[%s3 + $0x20] sm:$0xff]
    %v807 = vld [vmem:[%s3 + $0x28] sm:$0xff]
    %v808 = vld [vmem:[%s3 + $0x30] sm:$0xff]
    %v809 = vld [vmem:[%s3 + $0x38] sm:$0xff]
    %v810 = vld [vmem:[%s3 + $0x40] sm:$0xff]
    %v811 = vld [vmem:[%s3 + $0x48] sm:$0xff]
    %v812 = vld [vmem:[%s3 + $0x50] sm:$0xff]
    %v813 = vld [vmem:[%s3 + $0x58] sm:$0xff]
    %v814 = vld [vmem:[%s3 + $0x60] sm:$0xff]
    %v815 = vld [vmem:[%s3 + $0x68] sm:$0xff]
    %v816 = vld [vmem:[%s3 + $0x70] sm:$0xff]
    %v817 = vld [vmem:[%s3 + $0x78] sm:$0xff]
    %819 = vset.pattern.permute.xlu0 0
    %820 = vperm.xlu0 %819, %v802
    %v821 = vpop.permute.xlu0 %820
    %824 = vset.pattern.permute.xlu0 0
    %825 = vperm.xlu0 %824, %v803
    %v826 = vpop.permute.xlu0 %825
    %829 = vset.pattern.permute.xlu0 0
    %830 = vperm.xlu0 %829, %v804
    %v831 = vpop.permute.xlu0 %830
    %834 = vset.pattern.permute.xlu0 0
    %835 = vperm.xlu0 %834, %v805
    %v836 = vpop.permute.xlu0 %835
    %839 = vset.pattern.permute.xlu0 0
    %840 = vperm.xlu0 %839, %v806
    %v841 = vpop.permute.xlu0 %840
    %844 = vset.pattern.permute.xlu0 0
    %845 = vperm.xlu0 %844, %v807
    %v846 = vpop.permute.xlu0 %845
    %849 = vset.pattern.permute.xlu0 0
    %850 = vperm.xlu0 %849, %v808
    %v851 = vpop.permute.xlu0 %850
    %854 = vset.pattern.permute.xlu0 0
    %855 = vperm.xlu0 %854, %v809
    %v856 = vpop.permute.xlu0 %855
    %859 = vset.pattern.permute.xlu0 0
    %860 = vperm.xlu0 %859, %v810
    %v861 = vpop.permute.xlu0 %860
    %864 = vset.pattern.permute.xlu0 0
    %865 = vperm.xlu0 %864, %v811
    %v866 = vpop.permute.xlu0 %865
    %869 = vset.pattern.permute.xlu0 0
    %870 = vperm.xlu0 %869, %v812
    %v871 = vpop.permute.xlu0 %870
    %874 = vset.pattern.permute.xlu0 0
    %875 = vperm.xlu0 %874, %v813
    %v876 = vpop.permute.xlu0 %875
    %879 = vset.pattern.permute.xlu0 0
    %880 = vperm.xlu0 %879, %v814
    %v881 = vpop.permute.xlu0 %880
    %884 = vset.pattern.permute.xlu0 0
    %885 = vperm.xlu0 %884, %v815
    %v886 = vpop.permute.xlu0 %885
    %889 = vset.pattern.permute.xlu0 0
    %890 = vperm.xlu0 %889, %v816
    %v891 = vpop.permute.xlu0 %890
    %894 = vset.pattern.permute.xlu0 0
    %895 = vperm.xlu0 %894, %v817
    %v896 = vpop.permute.xlu0 %895
    %v898 = vmul.f32 %v786, %v821
    %v899 = vmul.f32 %v787, %v826
    %v900 = vmul.f32 %v788, %v831
    %v901 = vmul.f32 %v789, %v836
    %v902 = vmul.f32 %v790, %v841
    %v903 = vmul.f32 %v791, %v846
    %v904 = vmul.f32 %v792, %v851
    %v905 = vmul.f32 %v793, %v856
    %v906 = vmul.f32 %v794, %v861
    %v907 = vmul.f32 %v795, %v866
    %v908 = vmul.f32 %v796, %v871
    %v909 = vmul.f32 %v797, %v876
    %v910 = vmul.f32 %v798, %v881
    %v911 = vmul.f32 %v799, %v886
    %v912 = vmul.f32 %v800, %v891
    %v913 = vmul.f32 %v801, %v896
    %v914 = vpack.c.bf16 %v899, %v898
    %v915 = vpack.c.bf16 %v901, %v900
    %v916 = vpack.c.bf16 %v903, %v902
    %v917 = vpack.c.bf16 %v905, %v904
    %v918 = vpack.c.bf16 %v907, %v906
    %v919 = vpack.c.bf16 %v909, %v908
    %v920 = vpack.c.bf16 %v911, %v910
    %v921 = vpack.c.bf16 %v913, %v912
    %v930 = vunpack.c.l.b16 %v914
    %v931 = vunpack.c.h.b16 %v914
    %v932 = vunpack.c.l.b16 %v915
    %v933 = vunpack.c.h.b16 %v915
    %v934 = vunpack.c.l.b16 %v916
    %v935 = vunpack.c.h.b16 %v916
    %v936 = vunpack.c.l.b16 %v917
    %v937 = vunpack.c.h.b16 %v917
    %v938 = vunpack.c.l.b16 %v918
    %v939 = vunpack.c.h.b16 %v918
    %v940 = vunpack.c.l.b16 %v919
    %v941 = vunpack.c.h.b16 %v919
    %v942 = vunpack.c.l.b16 %v920
    %v943 = vunpack.c.h.b16 %v920
    %v944 = vunpack.c.l.b16 %v921
    %v945 = vunpack.c.h.b16 %v921
    %v946 = vpack.c.b16 %v930, %v930
    %v947 = vpack.c.b16 %v931, %v931
    %v948 = vpack.c.b16 %v932, %v932
    %v949 = vpack.c.b16 %v933, %v933
    %v950 = vpack.c.b16 %v934, %v934
    %v951 = vpack.c.b16 %v935, %v935
    %v952 = vpack.c.b16 %v936, %v936
    %v953 = vpack.c.b16 %v937, %v937
    %v954 = vpack.c.b16 %v938, %v938
    %v955 = vpack.c.b16 %v939, %v939
    %v956 = vpack.c.b16 %v940, %v940
    %v957 = vpack.c.b16 %v941, %v941
    %v958 = vpack.c.b16 %v942, %v942
    %v959 = vpack.c.b16 %v943, %v943
    %v960 = vpack.c.b16 %v944, %v944
    %v961 = vpack.c.b16 %v945, %v945
    %978 = vst [vmem:[%s7] sm:$0xf] %v946
    %979 = vst [vmem:[%s7 + $0x4] sm:$0xf] %v947
    %980 = vst [vmem:[%s7 + $0x8] sm:$0xf] %v948
    %981 = vst [vmem:[%s7 + $0xc] sm:$0xf] %v949
    %982 = vst [vmem:[%s7 + $0x10] sm:$0xf] %v950
    %983 = vst [vmem:[%s7 + $0x14] sm:$0xf] %v951
    %984 = vst [vmem:[%s7 + $0x18] sm:$0xf] %v952
    %985 = vst [vmem:[%s7 + $0x1c] sm:$0xf] %v953
    %986 = vst [vmem:[%s7 + $0x20] sm:$0xf] %v954
    %987 = vst [vmem:[%s7 + $0x24] sm:$0xf] %v955
    %988 = vst [vmem:[%s7 + $0x28] sm:$0xf] %v956
    %989 = vst [vmem:[%s7 + $0x2c] sm:$0xf] %v957
    %990 = vst [vmem:[%s7 + $0x30] sm:$0xf] %v958
    %991 = vst [vmem:[%s7 + $0x34] sm:$0xf] %v959
    %992 = vst [vmem:[%s7 + $0x38] sm:$0xf] %v960
    %993 = vst [vmem:[%s7 + $0x3c] sm:$0xf] %v961
  $region37: #{hybrid_gcn_sage.4} parent=0 // pred_fallthru
    _
  // Predicated region
  $region38: #{hybrid_gcn_sage.4} parent=0 // pred_check
    _
  $region39: #{hybrid_gcn_sage.4} parent=0 // pred_check_branch
    %995 = sbr.rel (0) target = $region41
  $region40: #{hybrid_gcn_sage.4} parent=0 // pred_region
    _
  $region41: #{hybrid_gcn_sage.4} parent=0 // pred_fallthru
    _
  // Predicated region
  $region42: #{hybrid_gcn_sage.4} parent=0 // pred_check
    _
  $region43: #{hybrid_gcn_sage.4} parent=0 // pred_check_branch
    %997 = sbr.rel (0) target = $region45
  $region44: #{hybrid_gcn_sage.4} parent=0 // pred_region
    _
  $region45: #{hybrid_gcn_sage.4} parent=0 // pred_fallthru
    _

</llo_original>
